<compile_context>
chip_gen: v7x
topology: tpu7x:2x2x1
jax: 0.10.0
libtpu: 0.0.40
codegen_flags: <defaults>
</compile_context>

<pallas_src>
import jax
import jax.numpy as jnp
from jax.experimental import pallas as pl
from jax.experimental.pallas import tpu as pltpu


def _round_up(v, m):
    return ((v + m - 1) // m) * m


def _pick_tile(limit, total, unit=128):
    """Largest multiple of `unit` that divides `total` and is <= limit."""
    limit = max(limit, unit)
    best = unit
    t = unit
    while t <= min(limit, total):
        if total % t == 0:
            best = t
        t += unit
    return best


# --------------------------------------------------------------- projection
def _proj_kernel(f_out):
    def kernel(x_ref, w_ref, a12_ref, h_ref, f12_ref):
        # h = x @ W for this row tile (hoisted out of the attention loop).
        h = jnp.dot(x_ref[...], w_ref[...],
                    preferred_element_type=jnp.float32,
                    precision=jax.lax.Precision.HIGHEST)
        # Fused attention-vector projection: a1 in lane 0, a2 in lane 1 ->
        # one lane-dense MXU matmul + lane-dense store.
        f12_ref[...] = jnp.dot(h, a12_ref[...],
                               preferred_element_type=jnp.float32,
                               precision=jax.lax.Precision.HIGHEST)
        # Plant a ones-lane in the (otherwise zero-padded) column f_out so
        # pass 2 folds the softmax row-sum into its MXU accumulate.
        lane = jax.lax.broadcasted_iota(jnp.int32, h.shape, 1)
        h_ref[...] = jnp.where(lane == f_out, jnp.float32(1.0), h)
    return kernel


# --------------------------------------------------------------- attention
def _attn_kernel(alpha, f_out, tc, v_resident, concat):
    def kernel(f1_ref, f2t_ref, bias_ref, hv_ref, out_ref, m_sc):
        j = pl.program_id(1)

        @pl.when(j == 0)
        def _():
            m_sc[...] = jnp.full_like(m_sc, -jnp.inf)
            out_ref[...] = jnp.zeros_like(out_ref)

        # e[i, k] = LeakyReLU(f1[i] + f2[k]); f2 arrives pre-transposed as
        # (1, TC) so the add is a lane broadcast (no in-loop XLU transpose).
        e = f1_ref[...] + f2t_ref[...]                    # (TR, TC)
        e = jnp.maximum(e, alpha * e)                     # LeakyReLU, 0<alpha<1
        s = e + bias_ref[...].astype(jnp.float32)         # additive adj bias

        # Online (flash-style) softmax across column tiles; att@h accumulates
        # straight into the VMEM-resident output block (no acc scratch).
        m_prev = m_sc[...]
        m_new = jnp.maximum(m_prev, jnp.max(s, axis=1, keepdims=True))
        corr = jnp.exp(m_prev - m_new)
        p = jnp.exp(s - m_new)
        if v_resident:
            v = hv_ref[pl.ds(pl.multiple_of(j * tc, tc), tc), :]
        else:
            v = hv_ref[...]
        out_ref[...] = corr * out_ref[...] + jnp.dot(
            p, v, preferred_element_type=jnp.float32,
            precision=jax.lax.Precision.DEFAULT)
        m_sc[...] = m_new

        @pl.when(j == pl.num_programs(1) - 1)
        def _():
            acc = out_ref[...]
            # Row-sum of p was folded into the MXU via the ones-lane at column
            # f_out (it picks up the corr rescale for free).
            l = acc[:, f_out:f_out + 1]
            hp = acc / l                                   # exact normalization
            if concat:
                # ELU; clamp the exp argument so discarded positive lanes
                # cannot overflow before the select.
                hp = jnp.where(hp > 0, hp,
                               jnp.exp(jnp.minimum(hp, 0.0)) - 1.0)
            out_ref[...] = hp
    return kernel


def rwr_layer_forward(x, W, a, adj, alpha=0.2, concat=True, *,
                      tile_rows=512, tile_cols=1024, v_resident=None):
    """x: (N, F_in), W: (F_in, F_out), a: (2*F_out, 1), adj: (N, N)."""
    N, f_in = x.shape
    f_out = W.shape[1]

    f_in_p = _round_up(f_in, 128)
    f_out_p = _round_up(f_out + 1, 128)   # +1 spare lane for the row-sum fold
    n_pad = _round_up(N, 128)

    # Tiles: multiples of 128 that divide n_pad (no lcm padding blow-up),
    # row tile capped so the "parallel" axis has >= 2 tiles (v7x megacore).
    tr = _pick_tile(tile_rows, n_pad)
    if n_pad >= 256 and n_pad // tr < 2:
        tr = _pick_tile(n_pad // 2, n_pad)
    tc = _pick_tile(tile_cols, n_pad)

    def pad2(arr, r, c, val=0.0):
        pr, pc = r - arr.shape[0], c - arr.shape[1]
        if pr or pc:
            return jnp.pad(arr, ((0, pr), (0, pc)), constant_values=val)
        return arr

    x_p = pad2(x.astype(jnp.float32), n_pad, f_in_p)
    w_p = pad2(W.astype(jnp.float32), f_in_p, f_out_p)

    a12 = jnp.zeros((f_out_p, 128), jnp.float32)
    a12 = a12.at[:f_out, 0].set(a[:f_out, 0].astype(jnp.float32))
    a12 = a12.at[:f_out, 1].set(a[f_out:, 0].astype(jnp.float32))

    # Adjacency enters only as (adj > 0): ship it as an additive bf16 bias
    # (0 keep / -9e15 drop).  Padded rows/cols are masked (-9e15).  Exact
    # after softmax because exp underflows to 0 for masked entries either way.
    bias = jnp.where(adj > 0, jnp.float32(0.0), jnp.float32(-9.0e15))
    bias_p = pad2(bias.astype(jnp.bfloat16), n_pad, n_pad, val=-9.0e15)

    # ---- pass 1: h = x @ W, f12 = h @ [a1 | a2 | 0...] (row-tiled) ----
    h_p, f12 = pl.pallas_call(
        _proj_kernel(f_out),
        out_shape=(jax.ShapeDtypeStruct((n_pad, f_out_p), jnp.float32),
                   jax.ShapeDtypeStruct((n_pad, 128), jnp.float32)),
        grid_spec=pltpu.PrefetchScalarGridSpec(
            num_scalar_prefetch=0,
            grid=(n_pad // tr,),
            in_specs=[
                pl.BlockSpec((tr, f_in_p), lambda i: (i, 0)),
                pl.BlockSpec((f_in_p, f_out_p), lambda i: (0, 0)),
                pl.BlockSpec((f_out_p, 128), lambda i: (0, 0)),
            ],
            out_specs=[
                pl.BlockSpec((tr, f_out_p), lambda i: (i, 0)),
                pl.BlockSpec((tr, 128), lambda i: (i, 0)),
            ]),
        compiler_params=pltpu.CompilerParams(
            dimension_semantics=("parallel",)),
    )(x_p, w_p, a12)

    f1 = f12[:, 0:1]                    # (n_pad, 1)
    f2t = jnp.transpose(f12[:, 1:2])    # (1, n_pad): one-time relayout in XLA

    # Keep h ("V") VMEM-resident across the whole attention grid when it fits
    # (eliminates its per-row-tile re-stream); otherwise stream per column.
    if v_resident is None:
        v_resident = n_pad * f_out_p * 4 <= 6 * 1024 * 1024
    if v_resident:
        hv_spec = pl.BlockSpec((n_pad, f_out_p), lambda i, j: (0, 0))
    else:
        hv_spec = pl.BlockSpec((tc, f_out_p), lambda i, j: (j, 0))

    grid = (n_pad // tr, n_pad // tc)
    hv_bytes = (n_pad * f_out_p * 4 if v_resident
                else grid[0] * n_pad * f_out_p * 4)
    cost = pl.CostEstimate(
        flops=2 * n_pad * n_pad * f_out_p + 8 * n_pad * n_pad,
        transcendentals=n_pad * n_pad,
        bytes_accessed=(n_pad * n_pad * 2          # bf16 adjacency bias
                        + hv_bytes                 # h as "V"
                        + n_pad * f_out_p * 4      # output
                        + 2 * n_pad * 4),          # f1 / f2^T
    )

    # ---- pass 2: masked softmax + att @ h (flash-style online softmax) ----
    out_p = pl.pallas_call(
        _attn_kernel(alpha, f_out, tc, v_resident, concat),
        out_shape=jax.ShapeDtypeStruct((n_pad, f_out_p), jnp.float32),
        grid_spec=pltpu.PrefetchScalarGridSpec(
            num_scalar_prefetch=0,
            grid=grid,
            in_specs=[
                pl.BlockSpec((tr, 1), lambda i, j: (i, 0)),    # f1 row tile
                pl.BlockSpec((1, tc), lambda i, j: (0, j)),    # f2^T col tile
                pl.BlockSpec((tr, tc), lambda i, j: (i, j)),   # adjacency bias
                hv_spec,                                       # h as "V"
            ],
            out_specs=pl.BlockSpec((tr, f_out_p), lambda i, j: (i, 0)),
            scratch_shapes=[
                pltpu.VMEM((tr, 1), jnp.float32),              # running max
            ]),
        compiler_params=pltpu.CompilerParams(
            dimension_semantics=("parallel", "arbitrary"),
            vmem_limit_bytes=48 * 1024 * 1024),
        cost_estimate=cost,
    )(f1, f2t, bias_p, h_p)

    return out_p[:N, :f_out]


def _xavier_uniform(key, shape, gain):
    fan_in, fan_out = shape[0], shape[1]
    bound = gain * (6.0 / (fan_in + fan_out)) ** 0.5
    return jax.random.uniform(key, shape, dtype=jnp.float32,
                              minval=-bound, maxval=bound)


if __name__ == "__main__":
    # Keep the f32 reference and the kernel's projection matmuls numerically
    # aligned (the previous case-B failure came from mismatched low-precision
    # matmul passes between kernel and reference, amplified through exp).
    jax.config.update("jax_default_matmul_precision", "highest")

    def reference(x, W, a, adj, alpha):
        f_out = W.shape[1]
        h = x @ W
        e = h @ a[:f_out] + (h @ a[f_out:]).T
        e = jnp.where(e > 0, e, alpha * e)
        att = jnp.where(adj > 0, e, jnp.full_like(e, -9.0e15))
        att = jax.nn.softmax(att, axis=1)
        return jax.nn.elu(att @ h)

    alpha = 0.2
    key = jax.random.PRNGKey(0)

    # A: tiny graph, single attention tile (resident V).
    # B: N not a tile multiple -> 2x2 attention grid exercising the online
    #    softmax reduction, the streamed-V path, and zero padding.
    # C: default (large) tiles, 2 row tiles for the parallel axis, resident V.
    cases = {
        "A": (8, 16, 32, {}),
        "B": (200, 16, 32, dict(tile_rows=128, tile_cols=128,
                                v_resident=False)),
        "C": (500, 16, 32, {}),
    }

    for name, (N, F_IN, F_OUT, opts) in cases.items():
        k_x, k_w, k_a, k_adj, key = jax.random.split(key, 5)
        x = jax.random.normal(k_x, (N, F_IN), dtype=jnp.float32)
        W = _xavier_uniform(k_w, (F_IN, F_OUT), gain=1.414)
        a = _xavier_uniform(k_a, (2 * F_OUT, 1), gain=1.414)

        adj_rnd = jax.random.uniform(k_adj, (N, N), dtype=jnp.float32)
        adj = (adj_rnd > 0.7).astype(jnp.float32)
        adj = jnp.maximum(adj, adj.T)
        adj = jnp.maximum(adj, jnp.eye(N, dtype=jnp.float32))  # self loops

        out = rwr_layer_forward(x, W, a, adj, alpha=alpha, **opts)
        out = jax.block_until_ready(out)

        ref = reference(x, W, a, adj, alpha)
        assert out.shape == ref.shape, f"case {name}: shape mismatch"
        max_err = float(jnp.max(jnp.abs(out - ref)))
        assert jnp.allclose(out, ref, atol=2e-3, rtol=2e-3), \
            f"case {name}: mismatch vs reference (max abs err {max_err:.2e})"

    print("KERNEL_OK")
</pallas_src>

<mosaic_0001>
module attributes {stable_mosaic.version = 11 : i64} {
  func.func @kernel(%arg0: i32, %arg1: memref<128x128xf32, #tpu.memory_space<vmem>>, %arg2: memref<128x128xf32, #tpu.memory_space<vmem>>, %arg3: memref<128x128xf32, #tpu.memory_space<vmem>>, %arg4: memref<128x128xf32, #tpu.memory_space<vmem>>, %arg5: memref<128x128xf32, #tpu.memory_space<vmem>>) attributes {dimension_semantics = [#tpu.dimension_semantics<parallel>], iteration_bounds = array<i64: 1>, scalar_prefetch = 0 : i64, scratch_operands = 0 : i64, tpu.core_type = #tpu.core_type<tc>, window_params = [{transform_indices = @transform_0, window_bounds = array<i64: 128, 128>}, {pipeline_mode = #tpu.pipeline_mode<synchronous>, transform_indices = @transform_1, window_bounds = array<i64: 128, 128>}, {pipeline_mode = #tpu.pipeline_mode<synchronous>, transform_indices = @transform_2, window_bounds = array<i64: 128, 128>}, {transform_indices = @transform_3, window_bounds = array<i64: 128, 128>}, {transform_indices = @transform_4, window_bounds = array<i64: 128, 128>}]} {
    %c0 = arith.constant 0 : index
    %c0_0 = arith.constant 0 : index
    %0 = vector.load %arg1[%c0, %c0_0] : memref<128x128xf32, #tpu.memory_space<vmem>>, vector<128x128xf32>
    %c0_1 = arith.constant 0 : index
    %c0_2 = arith.constant 0 : index
    %1 = vector.load %arg2[%c0_1, %c0_2] : memref<128x128xf32, #tpu.memory_space<vmem>>, vector<128x128xf32>
    %cst = arith.constant dense<0.000000e+00> : vector<128x128xf32>
    %2 = tpu.matmul %0, %1, %cst {dimension_numbers = #tpu.dot_dimension_numbers<[1], [0], [0], [1], [0, 0, 1, 1], [], []>, precision = #tpu.contract_precision<fp32>} : vector<128x128xf32>, vector<128x128xf32>, vector<128x128xf32> -> vector<128x128xf32>
    %c0_3 = arith.constant 0 : index
    %c0_4 = arith.constant 0 : index
    %3 = vector.load %arg3[%c0_3, %c0_4] : memref<128x128xf32, #tpu.memory_space<vmem>>, vector<128x128xf32>
    %cst_5 = arith.constant dense<0.000000e+00> : vector<128x128xf32>
    %4 = tpu.matmul %2, %3, %cst_5 {dimension_numbers = #tpu.dot_dimension_numbers<[1], [0], [0], [1], [0, 0, 1, 1], [], []>, precision = #tpu.contract_precision<fp32>} : vector<128x128xf32>, vector<128x128xf32>, vector<128x128xf32> -> vector<128x128xf32>
    %c0_6 = arith.constant 0 : index
    %c0_7 = arith.constant 0 : index
    %5 = vector.load %arg5[%c0_6, %c0_7] : memref<128x128xf32, #tpu.memory_space<vmem>>, vector<128x128xf32>
    tpu.vector_store %arg5[%c0_6, %c0_7], %4 {strides = array<i32>} : memref<128x128xf32, #tpu.memory_space<vmem>>, vector<128x128xf32>,
    %6 = tpu.iota {dimensions = array<i32: 1>} : vector<128x128xi32>
    %c32_i32 = arith.constant 32 : i32
    %7 = vector.broadcast %c32_i32 : i32 to vector<128x128xi32>
    %8 = arith.cmpi eq, %6, %7 : vector<128x128xi32>
    %cst_8 = arith.constant 1.000000e+00 : f32
    %9 = vector.broadcast %cst_8 : f32 to vector<128x128xf32>
    %10 = arith.select %8, %9, %2 : vector<128x128xi1>, vector<128x128xf32>
    %c0_9 = arith.constant 0 : index
    %c0_10 = arith.constant 0 : index
    %11 = vector.load %arg4[%c0_9, %c0_10] : memref<128x128xf32, #tpu.memory_space<vmem>>, vector<128x128xf32>
    tpu.vector_store %arg4[%c0_9, %c0_10], %10 {strides = array<i32>} : memref<128x128xf32, #tpu.memory_space<vmem>>, vector<128x128xf32>,
    return
  }
  func.func @transform_0(%arg0: i32) -> (i32, i32) {
    %c0_i32 = arith.constant 0 : i32
    %c0_i32_0 = arith.constant 0 : i32
    return %arg0, %c0_i32 : i32, i32
  }
  func.func @transform_1(%arg0: i32) -> (i32, i32) {
    %c0_i32 = arith.constant 0 : i32
    %c0_i32_0 = arith.constant 0 : i32
    %c0_i32_1 = arith.constant 0 : i32
    return %c0_i32, %c0_i32_0 : i32, i32
  }
  func.func @transform_2(%arg0: i32) -> (i32, i32) {
    %c0_i32 = arith.constant 0 : i32
    %c0_i32_0 = arith.constant 0 : i32
    %c0_i32_1 = arith.constant 0 : i32
    return %c0_i32, %c0_i32_0 : i32, i32
  }
  func.func @transform_3(%arg0: i32) -> (i32, i32) {
    %c0_i32 = arith.constant 0 : i32
    %c0_i32_0 = arith.constant 0 : i32
    return %arg0, %c0_i32 : i32, i32
  }
  func.func @transform_4(%arg0: i32) -> (i32, i32) {
    %c0_i32 = arith.constant 0 : i32
    %c0_i32_0 = arith.constant 0 : i32
    return %arg0, %c0_i32 : i32, i32
  }
}

</mosaic_0001>

<llo_original>
// kernel: tpu_custom_call.1
$region0: #{tpu_custom_call.1}
  #allocation0 [shape = 'u32[]', space=smem, size = 0x4, offset = 0x4, fixed_abs, tag = 'smem constant byte address 0x4 - core index']
  #allocation1 [shape = 'u32[144,128]{1,0:T(1,128)}', space=vmem, size = 0x12000, scoped, tag = 'internal scratch']
  %s0 = inlined_call_operand.hbm [shape: f32[128,128], index: 0, kind: input, shape index: {}]
  %s1 = inlined_call_operand.hbm [shape: f32[128,128], index: 1, kind: input, shape index: {}]
  %s2 = inlined_call_operand.hbm [shape: f32[128,128], index: 2, kind: input, shape index: {}]
  %s3 = inlined_call_operand.hbm [shape: f32[128,128], index: 3, kind: output, shape index: {0}]
  %s4 = inlined_call_operand.hbm [shape: f32[128,128], index: 4, kind: output, shape index: {1}]
  %5 = xla_tuple %s3, %s4
  %s6 = sld [smem:[#allocation0]]
  $region42: #{tpu_custom_call.1} parent=0
    _
  %s8 = ssub.s32 1, %s6
  %s9 = scalar_select 0, %s8, %s6
  $region1: #{tpu_custom_call.1} parent=0
    #allocation2 [shape = 'u8[65536]{0}', space=vmem, size = 0x10000, scoped, tag = 'input window, operand 0, single buffered']
    #allocation3 [shape = 's32[1]{0}', space=sflag, size = 0x4, scoped, tag = 'scoped memory for tpu_custom_call.1']
    #allocation4 [shape = 's32[1]{0}', space=sflag, size = 0x4, scoped, tag = 'scoped memory for tpu_custom_call.1']
    #allocation5 [shape = 'u8[65536]{0}', space=vmem, size = 0x10000, scoped, tag = 'input window, operand 1, single buffered']
    #allocation6 [shape = 's32[1]{0}', space=sflag, size = 0x4, scoped, tag = 'scoped memory for tpu_custom_call.1']
    #allocation7 [shape = 'u8[65536]{0}', space=vmem, size = 0x10000, scoped, tag = 'input window, operand 2, single buffered']
    #allocation8 [shape = 'u8[65536]{0}', space=vmem, size = 0x10000, scoped, tag = 'output window, operand 0, single buffered']
    #allocation9 [shape = 'u8[65536]{0}', space=vmem, size = 0x10000, scoped, tag = 'output window, operand 1, single buffered']
    #allocation10 [shape = 's32[1]{0}', space=sflag, size = 0x4, scoped, tag = 'scoped memory for tpu_custom_call.1']
    %10 = vsyncpa [#allocation3], 0
    %11 = vsyncpa [#allocation6], 0
    %12 = vsyncpa [#allocation4], 0
    %13 = vsyncpa [#allocation10], 0
    // Predicated region
    $region2: #{tpu_custom_call.1} parent=1 // pred_check
      _
    $region3: #{tpu_custom_call.1} parent=1 // pred_check_branch
      %15 = sbr.rel (0) target = $region5
    $region4: #{tpu_custom_call.1} parent=1 // pred_region
      %s17 = ssub.s32 2048, 2048
      %18 = vsyncadd [#allocation3], %s17
      %s19 = sshll.u32 [#allocation2], 4
      %s20 = int_to_ptr.vmem [resolvable:$true] %s19
      %25 = dma.hbm_to_vmem [thread:$0]  %s0, 2048, %s20, [#allocation3], 128, 128, 8
    $region5: #{tpu_custom_call.1} parent=1 // pred_fallthru
      _
    // Predicated region
    $region6: #{tpu_custom_call.1} parent=1 // pred_check
      _
    $region7: #{tpu_custom_call.1} parent=1 // pred_check_branch
      %27 = sbr.rel (0) target = $region9
    $region8: #{tpu_custom_call.1} parent=1 // pred_region
      %s29 = ssub.s32 2048, 2048
      %30 = vsyncadd [#allocation6], %s29
      %s31 = sshll.u32 [#allocation5], 4
      %s32 = int_to_ptr.vmem [resolvable:$true] %s31
      %37 = dma.hbm_to_vmem [thread:$0]  %s1, 2048, %s32, [#allocation6], 128, 128, 8
    $region9: #{tpu_custom_call.1} parent=1 // pred_fallthru
      _
    // Predicated region
    $region10: #{tpu_custom_call.1} parent=1 // pred_check
      _
    $region11: #{tpu_custom_call.1} parent=1 // pred_check_branch
      %39 = sbr.rel (0) target = $region13
    $region12: #{tpu_custom_call.1} parent=1 // pred_region
      %s41 = ssub.s32 2048, 2048
      %42 = vsyncadd [#allocation6], %s41
      %s43 = sshll.u32 [#allocation7], 4
      %s44 = int_to_ptr.vmem [resolvable:$true] %s43
      %49 = dma.hbm_to_vmem [thread:$0]  %s2, 2048, %s44, [#allocation6], 128, 128, 8
    $region13: #{tpu_custom_call.1} parent=1 // pred_fallthru
      _
    // Predicated region
    $region14: #{tpu_custom_call.1} parent=1 // pred_check
      _
    $region15: #{tpu_custom_call.1} parent=1 // pred_check_branch
      %51 = sbr.rel (0) target = $region17
    $region16: #{tpu_custom_call.1} parent=1 // pred_region
      %52 = dma.done [#allocation3], 2048
    $region17: #{tpu_custom_call.1} parent=1 // pred_fallthru
      _
    // Predicated region
    $region18: #{tpu_custom_call.1} parent=1 // pred_check
      _
    $region19: #{tpu_custom_call.1} parent=1 // pred_check_branch
      %54 = sbr.rel (0) target = $region21
    $region20: #{tpu_custom_call.1} parent=1 // pred_region
      %55 = dma.done [#allocation6], 2048
    $region21: #{tpu_custom_call.1} parent=1 // pred_fallthru
      _
    // Predicated region
    $region22: #{tpu_custom_call.1} parent=1 // pred_check
      _
    $region23: #{tpu_custom_call.1} parent=1 // pred_check_branch
      %57 = sbr.rel (0) target = $region25
    $region24: #{tpu_custom_call.1} parent=1 // pred_region
      %58 = dma.done [#allocation6], 2048
    $region25: #{tpu_custom_call.1} parent=1 // pred_fallthru
      _
    %v59 = vld [vmem:[#allocation2] sm:$0xff]
    %v60 = vld [vmem:[#allocation2 + $0x8] sm:$0xff]
    %v61 = vld [vmem:[#allocation2 + $0x10] sm:$0xff]
    %v62 = vld [vmem:[#allocation2 + $0x18] sm:$0xff]
    %v63 = vld [vmem:[#allocation2 + $0x20] sm:$0xff]
    %v64 = vld [vmem:[#allocation2 + $0x28] sm:$0xff]
    %v65 = vld [vmem:[#allocation2 + $0x30] sm:$0xff]
    %v66 = vld [vmem:[#allocation2 + $0x38] sm:$0xff]
    %v67 = vld [vmem:[#allocation2 + $0x40] sm:$0xff]
    %v68 = vld [vmem:[#allocation2 + $0x48] sm:$0xff]
    %v69 = vld [vmem:[#allocation2 + $0x50] sm:$0xff]
    %v70 = vld [vmem:[#allocation2 + $0x58] sm:$0xff]
    %v71 = vld [vmem:[#allocation2 + $0x60] sm:$0xff]
    %v72 = vld [vmem:[#allocation2 + $0x68] sm:$0xff]
    %v73 = vld [vmem:[#allocation2 + $0x70] sm:$0xff]
    %v74 = vld [vmem:[#allocation2 + $0x78] sm:$0xff]
    %v75 = vld [vmem:[#allocation5] sm:$0xff]
    %v76 = vld [vmem:[#allocation5 + $0x8] sm:$0xff]
    %v77 = vld [vmem:[#allocation5 + $0x10] sm:$0xff]
    %v78 = vld [vmem:[#allocation5 + $0x18] sm:$0xff]
    %v79 = vld [vmem:[#allocation5 + $0x20] sm:$0xff]
    %v80 = vld [vmem:[#allocation5 + $0x28] sm:$0xff]
    %v81 = vld [vmem:[#allocation5 + $0x30] sm:$0xff]
    %v82 = vld [vmem:[#allocation5 + $0x38] sm:$0xff]
    %v83 = vld [vmem:[#allocation5 + $0x40] sm:$0xff]
    %v84 = vld [vmem:[#allocation5 + $0x48] sm:$0xff]
    %v85 = vld [vmem:[#allocation5 + $0x50] sm:$0xff]
    %v86 = vld [vmem:[#allocation5 + $0x58] sm:$0xff]
    %v87 = vld [vmem:[#allocation5 + $0x60] sm:$0xff]
    %v88 = vld [vmem:[#allocation5 + $0x68] sm:$0xff]
    %v89 = vld [vmem:[#allocation5 + $0x70] sm:$0xff]
    %v90 = vld [vmem:[#allocation5 + $0x78] sm:$0xff]
    %91 = vmatprep.subr.mxu0 0.0
    %v92 = vand.u32 %v75, 4294901760
    %93 = vmatpush1.msra.mxu0 %v92
    %94 = vmatprep.subr.mxu0 0.0
    %v95 = vand.u32 %v76, 4294901760
    %96 = vmatpush1.msra.mxu0 %v95
    %97 = vmatprep.subr.mxu0 0.0
    %v98 = vand.u32 %v77, 4294901760
    %99 = vmatpush1.msra.mxu0 %v98
    %100 = vmatprep.subr.mxu0 0.0
    %v101 = vand.u32 %v78, 4294901760
    %102 = vmatpush1.msra.mxu0 %v101
    %103 = vmatprep.subr.mxu0 0.0
    %v104 = vand.u32 %v79, 4294901760
    %105 = vmatpush1.msra.mxu0 %v104
    %106 = vmatprep.subr.mxu0 0.0
    %v107 = vand.u32 %v80, 4294901760
    %108 = vmatpush1.msra.mxu0 %v107
    %109 = vmatprep.subr.mxu0 0.0
    %v110 = vand.u32 %v81, 4294901760
    %111 = vmatpush1.msra.mxu0 %v110
    %112 = vmatprep.subr.mxu0 0.0
    %v113 = vand.u32 %v82, 4294901760
    %114 = vmatpush1.msra.mxu0 %v113
    %115 = vmatprep.subr.mxu0 0.0
    %v116 = vand.u32 %v83, 4294901760
    %117 = vmatpush1.msra.mxu0 %v116
    %118 = vmatprep.subr.mxu0 0.0
    %v119 = vand.u32 %v84, 4294901760
    %120 = vmatpush1.msra.mxu0 %v119
    %121 = vmatprep.subr.mxu0 0.0
    %v122 = vand.u32 %v85, 4294901760
    %123 = vmatpush1.msra.mxu0 %v122
    %124 = vmatprep.subr.mxu0 0.0
    %v125 = vand.u32 %v86, 4294901760
    %126 = vmatpush1.msra.mxu0 %v125
    %127 = vmatprep.subr.mxu0 0.0
    %v128 = vand.u32 %v87, 4294901760
    %129 = vmatpush1.msra.mxu0 %v128
    %130 = vmatprep.subr.mxu0 0.0
    %v131 = vand.u32 %v88, 4294901760
    %132 = vmatpush1.msra.mxu0 %v131
    %133 = vmatprep.subr.mxu0 0.0
    %v134 = vand.u32 %v89, 4294901760
    %135 = vmatpush1.msra.mxu0 %v134
    %136 = vmatprep.subr.mxu0 0.0
    %v137 = vand.u32 %v90, 4294901760
    %138 = vmatpush1.msra.mxu0 %v137
    %139 = vmatprep.subr.mxu0 0.0
    %140 = vmatpush1.msra.mxu0 0.0
    %141 = vmatprep.subr.mxu0 0.0
    %142 = vmatpush1.msra.mxu0 0.0
    %143 = vmatprep.subr.mxu0 0.0
    %144 = vmatpush1.msra.mxu0 0.0
    %145 = vmatprep.subr.mxu0 0.0
    %146 = vmatpush1.msra.mxu0 0.0
    %147 = vmatprep.subr.mxu0 0.0
    %148 = vmatpush1.msra.mxu0 0.0
    %149 = vmatprep.subr.mxu0 0.0
    %150 = vmatpush1.msra.mxu0 0.0
    %151 = vmatprep.subr.mxu0 0.0
    %152 = vmatpush1.msra.mxu0 0.0
    %153 = vmatprep.subr.mxu0 0.0
    %154 = vmatpush1.msra.mxu0 0.0
    %155 = vmatprep.subr.mxu0 0.0
    %156 = vmatpush1.msra.mxu0 0.0
    %157 = vmatprep.subr.mxu0 0.0
    %158 = vmatpush1.msra.mxu0 0.0
    %159 = vmatprep.subr.mxu0 0.0
    %160 = vmatpush1.msra.mxu0 0.0
    %161 = vmatprep.subr.mxu0 0.0
    %162 = vmatpush1.msra.mxu0 0.0
    %163 = vmatprep.subr.mxu0 0.0
    %164 = vmatpush1.msra.mxu0 0.0
    %165 = vmatprep.subr.mxu0 0.0
    %166 = vmatpush1.msra.mxu0 0.0
    %167 = vmatprep.subr.mxu0 0.0
    %168 = vmatpush1.msra.mxu0 0.0
    %169 = vmatprep.subr.mxu0 0.0
    %170 = vmatpush1.msra.mxu0 0.0
    %171 = vmatprep.mubr.f32.mxu0 0.0
    %v172 = vand.u32 %v59, 4294901760
    %v173 = vsub.f32 %v59, %v172
    %v174 = vand.u32 %v173, 4294901760
    %v175 = vsub.f32 %v173, %v174
    %v176 = vand.u32 %v175, 4294901760
    %177 = vmatmul.mubr.f32.gmra.mrb[0].mxu0 %v176
    %v178 = vpop.f32.mrb[0].mxu0
    %v179 = vadd.f32 0.0, %v178
    %v180 = vpop.f32.mrb[0].mxu0
    %181 = vmatprep.mubr.f32.mxu0 0.0
    %v182 = vand.u32 %v60, 4294901760
    %v183 = vsub.f32 %v60, %v182
    %v184 = vand.u32 %v183, 4294901760
    %v185 = vsub.f32 %v183, %v184
    %v186 = vand.u32 %v185, 4294901760
    %187 = vmatmul.mubr.f32.gmra.mrb[0].mxu0 %v186
    %v188 = vpop.f32.mrb[0].mxu0
    %v189 = vadd.f32 0.0, %v188
    %v190 = vpop.f32.mrb[0].mxu0
    %191 = vmatprep.mubr.f32.mxu0 0.0
    %v192 = vand.u32 %v61, 4294901760
    %v193 = vsub.f32 %v61, %v192
    %v194 = vand.u32 %v193, 4294901760
    %v195 = vsub.f32 %v193, %v194
    %v196 = vand.u32 %v195, 4294901760
    %197 = vmatmul.mubr.f32.gmra.mrb[0].mxu0 %v196
    %v198 = vpop.f32.mrb[0].mxu0
    %v199 = vadd.f32 0.0, %v198
    %v200 = vpop.f32.mrb[0].mxu0
    %201 = vmatprep.mubr.f32.mxu0 0.0
    %v202 = vand.u32 %v62, 4294901760
    %v203 = vsub.f32 %v62, %v202
    %v204 = vand.u32 %v203, 4294901760
    %v205 = vsub.f32 %v203, %v204
    %v206 = vand.u32 %v205, 4294901760
    %207 = vmatmul.mubr.f32.gmra.mrb[0].mxu0 %v206
    %v208 = vpop.f32.mrb[0].mxu0
    %v209 = vadd.f32 0.0, %v208
    %v210 = vpop.f32.mrb[0].mxu0
    %211 = vmatprep.mubr.f32.mxu0 0.0
    %v212 = vand.u32 %v63, 4294901760
    %v213 = vsub.f32 %v63, %v212
    %v214 = vand.u32 %v213, 4294901760
    %v215 = vsub.f32 %v213, %v214
    %v216 = vand.u32 %v215, 4294901760
    %217 = vmatmul.mubr.f32.gmra.mrb[0].mxu0 %v216
    %v218 = vpop.f32.mrb[0].mxu0
    %v219 = vadd.f32 0.0, %v218
    %v220 = vpop.f32.mrb[0].mxu0
    %221 = vmatprep.mubr.f32.mxu0 0.0
    %v222 = vand.u32 %v64, 4294901760
    %v223 = vsub.f32 %v64, %v222
    %v224 = vand.u32 %v223, 4294901760
    %v225 = vsub.f32 %v223, %v224
    %v226 = vand.u32 %v225, 4294901760
    %227 = vmatmul.mubr.f32.gmra.mrb[0].mxu0 %v226
    %v228 = vpop.f32.mrb[0].mxu0
    %v229 = vadd.f32 0.0, %v228
    %v230 = vpop.f32.mrb[0].mxu0
    %231 = vmatprep.mubr.f32.mxu0 0.0
    %v232 = vand.u32 %v65, 4294901760
    %v233 = vsub.f32 %v65, %v232
    %v234 = vand.u32 %v233, 4294901760
    %v235 = vsub.f32 %v233, %v234
    %v236 = vand.u32 %v235, 4294901760
    %237 = vmatmul.mubr.f32.gmra.mrb[0].mxu0 %v236
    %v238 = vpop.f32.mrb[0].mxu0
    %v239 = vadd.f32 0.0, %v238
    %v240 = vpop.f32.mrb[0].mxu0
    %241 = vmatprep.mubr.f32.mxu0 0.0
    %v242 = vand.u32 %v66, 4294901760
    %v243 = vsub.f32 %v66, %v242
    %v244 = vand.u32 %v243, 4294901760
    %v245 = vsub.f32 %v243, %v244
    %v246 = vand.u32 %v245, 4294901760
    %247 = vmatmul.mubr.f32.gmra.mrb[0].mxu0 %v246
    %v248 = vpop.f32.mrb[0].mxu0
    %v249 = vadd.f32 0.0, %v248
    %v250 = vpop.f32.mrb[0].mxu0
    %251 = vmatprep.mubr.f32.mxu0 0.0
    %v252 = vand.u32 %v67, 4294901760
    %v253 = vsub.f32 %v67, %v252
    %v254 = vand.u32 %v253, 4294901760
    %v255 = vsub.f32 %v253, %v254
    %v256 = vand.u32 %v255, 4294901760
    %257 = vmatmul.mubr.f32.gmra.mrb[0].mxu0 %v256
    %v258 = vpop.f32.mrb[0].mxu0
    %v259 = vadd.f32 0.0, %v258
    %v260 = vpop.f32.mrb[0].mxu0
    %261 = vmatprep.mubr.f32.mxu0 0.0
    %v262 = vand.u32 %v68, 4294901760
    %v263 = vsub.f32 %v68, %v262
    %v264 = vand.u32 %v263, 4294901760
    %v265 = vsub.f32 %v263, %v264
    %v266 = vand.u32 %v265, 4294901760
    %267 = vmatmul.mubr.f32.gmra.mrb[0].mxu0 %v266
    %v268 = vpop.f32.mrb[0].mxu0
    %v269 = vadd.f32 0.0, %v268
    %v270 = vpop.f32.mrb[0].mxu0
    %271 = vmatprep.mubr.f32.mxu0 0.0
    %v272 = vand.u32 %v69, 4294901760
    %v273 = vsub.f32 %v69, %v272
    %v274 = vand.u32 %v273, 4294901760
    %v275 = vsub.f32 %v273, %v274
    %v276 = vand.u32 %v275, 4294901760
    %277 = vmatmul.mubr.f32.gmra.mrb[0].mxu0 %v276
    %v278 = vpop.f32.mrb[0].mxu0
    %v279 = vadd.f32 0.0, %v278
    %v280 = vpop.f32.mrb[0].mxu0
    %281 = vmatprep.mubr.f32.mxu0 0.0
    %v282 = vand.u32 %v70, 4294901760
    %v283 = vsub.f32 %v70, %v282
    %v284 = vand.u32 %v283, 4294901760
    %v285 = vsub.f32 %v283, %v284
    %v286 = vand.u32 %v285, 4294901760
    %287 = vmatmul.mubr.f32.gmra.mrb[0].mxu0 %v286
    %v288 = vpop.f32.mrb[0].mxu0
    %v289 = vadd.f32 0.0, %v288
    %v290 = vpop.f32.mrb[0].mxu0
    %291 = vmatprep.mubr.f32.mxu0 0.0
    %v292 = vand.u32 %v71, 4294901760
    %v293 = vsub.f32 %v71, %v292
    %v294 = vand.u32 %v293, 4294901760
    %v295 = vsub.f32 %v293, %v294
    %v296 = vand.u32 %v295, 4294901760
    %297 = vmatmul.mubr.f32.gmra.mrb[0].mxu0 %v296
    %v298 = vpop.f32.mrb[0].mxu0
    %v299 = vadd.f32 0.0, %v298
    %v300 = vpop.f32.mrb[0].mxu0
    %301 = vmatprep.mubr.f32.mxu0 0.0
    %v302 = vand.u32 %v72, 4294901760
    %v303 = vsub.f32 %v72, %v302
    %v304 = vand.u32 %v303, 4294901760
    %v305 = vsub.f32 %v303, %v304
    %v306 = vand.u32 %v305, 4294901760
    %307 = vmatmul.mubr.f32.gmra.mrb[0].mxu0 %v306
    %v308 = vpop.f32.mrb[0].mxu0
    %v309 = vadd.f32 0.0, %v308
    %v310 = vpop.f32.mrb[0].mxu0
    %311 = vmatprep.mubr.f32.mxu0 0.0
    %v312 = vand.u32 %v73, 4294901760
    %v313 = vsub.f32 %v73, %v312
    %v314 = vand.u32 %v313, 4294901760
    %v315 = vsub.f32 %v313, %v314
    %v316 = vand.u32 %v315, 4294901760
    %317 = vmatmul.mubr.f32.gmra.mrb[0].mxu0 %v316
    %v318 = vpop.f32.mrb[0].mxu0
    %v319 = vadd.f32 0.0, %v318
    %v320 = vpop.f32.mrb[0].mxu0
    %321 = vmatprep.mubr.f32.mxu0 0.0
    %v322 = vand.u32 %v74, 4294901760
    %v323 = vsub.f32 %v74, %v322
    %v324 = vand.u32 %v323, 4294901760
    %v325 = vsub.f32 %v323, %v324
    %v326 = vand.u32 %v325, 4294901760
    %327 = vmatmul.mubr.f32.gmra.mrb[0].mxu0 %v326
    %v328 = vpop.f32.mrb[0].mxu0
    %v329 = vadd.f32 0.0, %v328
    %v330 = vpop.f32.mrb[0].mxu0
    %331 = vdwg.mxu0
    %332 = vmatprep.subr.mxu0 0.0
    %v333 = vand.u32 %v75, 4294901760
    %v334 = vsub.f32 %v75, %v333
    %v335 = vand.u32 %v334, 4294901760
    %v336 = vsub.f32 %v334, %v335
    %v337 = vand.u32 %v336, 4294901760
    %338 = vmatpush1.msra.mxu0 %v337
    %339 = vmatprep.subr.mxu0 0.0
    %v340 = vand.u32 %v76, 4294901760
    %v341 = vsub.f32 %v76, %v340
    %v342 = vand.u32 %v341, 4294901760
    %v343 = vsub.f32 %v341, %v342
    %v344 = vand.u32 %v343, 4294901760
    %345 = vmatpush1.msra.mxu0 %v344
    %346 = vmatprep.subr.mxu0 0.0
    %v347 = vand.u32 %v77, 4294901760
    %v348 = vsub.f32 %v77, %v347
    %v349 = vand.u32 %v348, 4294901760
    %v350 = vsub.f32 %v348, %v349
    %v351 = vand.u32 %v350, 4294901760
    %352 = vmatpush1.msra.mxu0 %v351
    %353 = vmatprep.subr.mxu0 0.0
    %v354 = vand.u32 %v78, 4294901760
    %v355 = vsub.f32 %v78, %v354
    %v356 = vand.u32 %v355, 4294901760
    %v357 = vsub.f32 %v355, %v356
    %v358 = vand.u32 %v357, 4294901760
    %359 = vmatpush1.msra.mxu0 %v358
    %360 = vmatprep.subr.mxu0 0.0
    %v361 = vand.u32 %v79, 4294901760
    %v362 = vsub.f32 %v79, %v361
    %v363 = vand.u32 %v362, 4294901760
    %v364 = vsub.f32 %v362, %v363
    %v365 = vand.u32 %v364, 4294901760
    %366 = vmatpush1.msra.mxu0 %v365
    %367 = vmatprep.subr.mxu0 0.0
    %v368 = vand.u32 %v80, 4294901760
    %v369 = vsub.f32 %v80, %v368
    %v370 = vand.u32 %v369, 4294901760
    %v371 = vsub.f32 %v369, %v370
    %v372 = vand.u32 %v371, 4294901760
    %373 = vmatpush1.msra.mxu0 %v372
    %374 = vmatprep.subr.mxu0 0.0
    %v375 = vand.u32 %v81, 4294901760
    %v376 = vsub.f32 %v81, %v375
    %v377 = vand.u32 %v376, 4294901760
    %v378 = vsub.f32 %v376, %v377
    %v379 = vand.u32 %v378, 4294901760
    %380 = vmatpush1.msra.mxu0 %v379
    %381 = vmatprep.subr.mxu0 0.0
    %v382 = vand.u32 %v82, 4294901760
    %v383 = vsub.f32 %v82, %v382
    %v384 = vand.u32 %v383, 4294901760
    %v385 = vsub.f32 %v383, %v384
    %v386 = vand.u32 %v385, 4294901760
    %387 = vmatpush1.msra.mxu0 %v386
    %388 = vmatprep.subr.mxu0 0.0
    %v389 = vand.u32 %v83, 4294901760
    %v390 = vsub.f32 %v83, %v389
    %v391 = vand.u32 %v390, 4294901760
    %v392 = vsub.f32 %v390, %v391
    %v393 = vand.u32 %v392, 4294901760
    %394 = vmatpush1.msra.mxu0 %v393
    %395 = vmatprep.subr.mxu0 0.0
    %v396 = vand.u32 %v84, 4294901760
    %v397 = vsub.f32 %v84, %v396
    %v398 = vand.u32 %v397, 4294901760
    %v399 = vsub.f32 %v397, %v398
    %v400 = vand.u32 %v399, 4294901760
    %401 = vmatpush1.msra.mxu0 %v400
    %402 = vmatprep.subr.mxu0 0.0
    %v403 = vand.u32 %v85, 4294901760
    %v404 = vsub.f32 %v85, %v403
    %v405 = vand.u32 %v404, 4294901760
    %v406 = vsub.f32 %v404, %v405
    %v407 = vand.u32 %v406, 4294901760
    %408 = vmatpush1.msra.mxu0 %v407
    %409 = vmatprep.subr.mxu0 0.0
    %v410 = vand.u32 %v86, 4294901760
    %v411 = vsub.f32 %v86, %v410
    %v412 = vand.u32 %v411, 4294901760
    %v413 = vsub.f32 %v411, %v412
    %v414 = vand.u32 %v413, 4294901760
    %415 = vmatpush1.msra.mxu0 %v414
    %416 = vmatprep.subr.mxu0 0.0
    %v417 = vand.u32 %v87, 4294901760
    %v418 = vsub.f32 %v87, %v417
    %v419 = vand.u32 %v418, 4294901760
    %v420 = vsub.f32 %v418, %v419
    %v421 = vand.u32 %v420, 4294901760
    %422 = vmatpush1.msra.mxu0 %v421
    %423 = vmatprep.subr.mxu0 0.0
    %v424 = vand.u32 %v88, 4294901760
    %v425 = vsub.f32 %v88, %v424
    %v426 = vand.u32 %v425, 4294901760
    %v427 = vsub.f32 %v425, %v426
    %v428 = vand.u32 %v427, 4294901760
    %429 = vmatpush1.msra.mxu0 %v428
    %430 = vmatprep.subr.mxu0 0.0
    %v431 = vand.u32 %v89, 4294901760
    %v432 = vsub.f32 %v89, %v431
    %v433 = vand.u32 %v432, 4294901760
    %v434 = vsub.f32 %v432, %v433
    %v435 = vand.u32 %v434, 4294901760
    %436 = vmatpush1.msra.mxu0 %v435
    %437 = vmatprep.subr.mxu0 0.0
    %v438 = vand.u32 %v90, 4294901760
    %v439 = vsub.f32 %v90, %v438
    %v440 = vand.u32 %v439, 4294901760
    %v441 = vsub.f32 %v439, %v440
    %v442 = vand.u32 %v441, 4294901760
    %443 = vmatpush1.msra.mxu0 %v442
    %444 = vmatprep.subr.mxu0 0.0
    %445 = vmatpush1.msra.mxu0 0.0
    %446 = vmatprep.subr.mxu0 0.0
    %447 = vmatpush1.msra.mxu0 0.0
    %448 = vmatprep.subr.mxu0 0.0
    %449 = vmatpush1.msra.mxu0 0.0
    %450 = vmatprep.subr.mxu0 0.0
    %451 = vmatpush1.msra.mxu0 0.0
    %452 = vmatprep.subr.mxu0 0.0
    %453 = vmatpush1.msra.mxu0 0.0
    %454 = vmatprep.subr.mxu0 0.0
    %455 = vmatpush1.msra.mxu0 0.0
    %456 = vmatprep.subr.mxu0 0.0
    %457 = vmatpush1.msra.mxu0 0.0
    %458 = vmatprep.subr.mxu0 0.0
    %459 = vmatpush1.msra.mxu0 0.0
    %460 = vmatprep.subr.mxu0 0.0
    %461 = vmatpush1.msra.mxu0 0.0
    %462 = vmatprep.subr.mxu0 0.0
    %463 = vmatpush1.msra.mxu0 0.0
    %464 = vmatprep.subr.mxu0 0.0
    %465 = vmatpush1.msra.mxu0 0.0
    %466 = vmatprep.subr.mxu0 0.0
    %467 = vmatpush1.msra.mxu0 0.0
    %468 = vmatprep.subr.mxu0 0.0
    %469 = vmatpush1.msra.mxu0 0.0
    %470 = vmatprep.subr.mxu0 0.0
    %471 = vmatpush1.msra.mxu0 0.0
    %472 = vmatprep.subr.mxu0 0.0
    %473 = vmatpush1.msra.mxu0 0.0
    %474 = vmatprep.subr.mxu0 0.0
    %475 = vmatpush1.msra.mxu0 0.0
    %476 = vmatprep.mubr.f32.mxu0 0.0
    %v477 = vand.u32 %v59, 4294901760
    %478 = vmatmul.mubr.f32.gmra.mrb[0].mxu0 %v477
    %v479 = vpop.f32.mrb[0].mxu0
    %v480 = vadd.f32 %v179, %v479
    %v481 = vpop.f32.mrb[0].mxu0
    %482 = vmatprep.mubr.f32.mxu0 0.0
    %v483 = vand.u32 %v60, 4294901760
    %484 = vmatmul.mubr.f32.gmra.mrb[0].mxu0 %v483
    %v485 = vpop.f32.mrb[0].mxu0
    %v486 = vadd.f32 %v189, %v485
    %v487 = vpop.f32.mrb[0].mxu0
    %488 = vmatprep.mubr.f32.mxu0 0.0
    %v489 = vand.u32 %v61, 4294901760
    %490 = vmatmul.mubr.f32.gmra.mrb[0].mxu0 %v489
    %v491 = vpop.f32.mrb[0].mxu0
    %v492 = vadd.f32 %v199, %v491
    %v493 = vpop.f32.mrb[0].mxu0
    %494 = vmatprep.mubr.f32.mxu0 0.0
    %v495 = vand.u32 %v62, 4294901760
    %496 = vmatmul.mubr.f32.gmra.mrb[0].mxu0 %v495
    %v497 = vpop.f32.mrb[0].mxu0
    %v498 = vadd.f32 %v209, %v497
    %v499 = vpop.f32.mrb[0].mxu0
    %500 = vmatprep.mubr.f32.mxu0 0.0
    %v501 = vand.u32 %v63, 4294901760
    %502 = vmatmul.mubr.f32.gmra.mrb[0].mxu0 %v501
    %v503 = vpop.f32.mrb[0].mxu0
    %v504 = vadd.f32 %v219, %v503
    %v505 = vpop.f32.mrb[0].mxu0
    %506 = vmatprep.mubr.f32.mxu0 0.0
    %v507 = vand.u32 %v64, 4294901760
    %508 = vmatmul.mubr.f32.gmra.mrb[0].mxu0 %v507
    %v509 = vpop.f32.mrb[0].mxu0
    %v510 = vadd.f32 %v229, %v509
    %v511 = vpop.f32.mrb[0].mxu0
    %512 = vmatprep.mubr.f32.mxu0 0.0
    %v513 = vand.u32 %v65, 4294901760
    %514 = vmatmul.mubr.f32.gmra.mrb[0].mxu0 %v513
    %v515 = vpop.f32.mrb[0].mxu0
    %v516 = vadd.f32 %v239, %v515
    %v517 = vpop.f32.mrb[0].mxu0
    %518 = vmatprep.mubr.f32.mxu0 0.0
    %v519 = vand.u32 %v66, 4294901760
    %520 = vmatmul.mubr.f32.gmra.mrb[0].mxu0 %v519
    %v521 = vpop.f32.mrb[0].mxu0
    %v522 = vadd.f32 %v249, %v521
    %v523 = vpop.f32.mrb[0].mxu0
    %524 = vmatprep.mubr.f32.mxu0 0.0
    %v525 = vand.u32 %v67, 4294901760
    %526 = vmatmul.mubr.f32.gmra.mrb[0].mxu0 %v525
    %v527 = vpop.f32.mrb[0].mxu0
    %v528 = vadd.f32 %v259, %v527
    %v529 = vpop.f32.mrb[0].mxu0
    %530 = vmatprep.mubr.f32.mxu0 0.0
    %v531 = vand.u32 %v68, 4294901760
    %532 = vmatmul.mubr.f32.gmra.mrb[0].mxu0 %v531
    %v533 = vpop.f32.mrb[0].mxu0
    %v534 = vadd.f32 %v269, %v533
    %v535 = vpop.f32.mrb[0].mxu0
    %536 = vmatprep.mubr.f32.mxu0 0.0
    %v537 = vand.u32 %v69, 4294901760
    %538 = vmatmul.mubr.f32.gmra.mrb[0].mxu0 %v537
    %v539 = vpop.f32.mrb[0].mxu0
    %v540 = vadd.f32 %v279, %v539
    %v541 = vpop.f32.mrb[0].mxu0
    %542 = vmatprep.mubr.f32.mxu0 0.0
    %v543 = vand.u32 %v70, 4294901760
    %544 = vmatmul.mubr.f32.gmra.mrb[0].mxu0 %v543
    %v545 = vpop.f32.mrb[0].mxu0
    %v546 = vadd.f32 %v289, %v545
    %v547 = vpop.f32.mrb[0].mxu0
    %548 = vmatprep.mubr.f32.mxu0 0.0
    %v549 = vand.u32 %v71, 4294901760
    %550 = vmatmul.mubr.f32.gmra.mrb[0].mxu0 %v549
    %v551 = vpop.f32.mrb[0].mxu0
    %v552 = vadd.f32 %v299, %v551
    %v553 = vpop.f32.mrb[0].mxu0
    %554 = vmatprep.mubr.f32.mxu0 0.0
    %v555 = vand.u32 %v72, 4294901760
    %556 = vmatmul.mubr.f32.gmra.mrb[0].mxu0 %v555
    %v557 = vpop.f32.mrb[0].mxu0
    %v558 = vadd.f32 %v309, %v557
    %v559 = vpop.f32.mrb[0].mxu0
    %560 = vmatprep.mubr.f32.mxu0 0.0
    %v561 = vand.u32 %v73, 4294901760
    %562 = vmatmul.mubr.f32.gmra.mrb[0].mxu0 %v561
    %v563 = vpop.f32.mrb[0].mxu0
    %v564 = vadd.f32 %v319, %v563
    %v565 = vpop.f32.mrb[0].mxu0
    %566 = vmatprep.mubr.f32.mxu0 0.0
    %v567 = vand.u32 %v74, 4294901760
    %568 = vmatmul.mubr.f32.gmra.mrb[0].mxu0 %v567
    %v569 = vpop.f32.mrb[0].mxu0
    %v570 = vadd.f32 %v329, %v569
    %v571 = vpop.f32.mrb[0].mxu0
    %572 = vdwg.mxu0
    %573 = vmatprep.subr.mxu0 0.0
    %v574 = vand.u32 %v75, 4294901760
    %v575 = vsub.f32 %v75, %v574
    %576 = vmatpush1.msra.mxu0 %v575
    %577 = vmatprep.subr.mxu0 0.0
    %v578 = vand.u32 %v76, 4294901760
    %v579 = vsub.f32 %v76, %v578
    %580 = vmatpush1.msra.mxu0 %v579
    %581 = vmatprep.subr.mxu0 0.0
    %v582 = vand.u32 %v77, 4294901760
    %v583 = vsub.f32 %v77, %v582
    %584 = vmatpush1.msra.mxu0 %v583
    %585 = vmatprep.subr.mxu0 0.0
    %v586 = vand.u32 %v78, 4294901760
    %v587 = vsub.f32 %v78, %v586
    %588 = vmatpush1.msra.mxu0 %v587
    %589 = vmatprep.subr.mxu0 0.0
    %v590 = vand.u32 %v79, 4294901760
    %v591 = vsub.f32 %v79, %v590
    %592 = vmatpush1.msra.mxu0 %v591
    %593 = vmatprep.subr.mxu0 0.0
    %v594 = vand.u32 %v80, 4294901760
    %v595 = vsub.f32 %v80, %v594
    %596 = vmatpush1.msra.mxu0 %v595
    %597 = vmatprep.subr.mxu0 0.0
    %v598 = vand.u32 %v81, 4294901760
    %v599 = vsub.f32 %v81, %v598
    %600 = vmatpush1.msra.mxu0 %v599
    %601 = vmatprep.subr.mxu0 0.0
    %v602 = vand.u32 %v82, 4294901760
    %v603 = vsub.f32 %v82, %v602
    %604 = vmatpush1.msra.mxu0 %v603
    %605 = vmatprep.subr.mxu0 0.0
    %v606 = vand.u32 %v83, 4294901760
    %v607 = vsub.f32 %v83, %v606
    %608 = vmatpush1.msra.mxu0 %v607
    %609 = vmatprep.subr.mxu0 0.0
    %v610 = vand.u32 %v84, 4294901760
    %v611 = vsub.f32 %v84, %v610
    %612 = vmatpush1.msra.mxu0 %v611
    %613 = vmatprep.subr.mxu0 0.0
    %v614 = vand.u32 %v85, 4294901760
    %v615 = vsub.f32 %v85, %v614
    %616 = vmatpush1.msra.mxu0 %v615
    %617 = vmatprep.subr.mxu0 0.0
    %v618 = vand.u32 %v86, 4294901760
    %v619 = vsub.f32 %v86, %v618
    %620 = vmatpush1.msra.mxu0 %v619
    %621 = vmatprep.subr.mxu0 0.0
    %v622 = vand.u32 %v87, 4294901760
    %v623 = vsub.f32 %v87, %v622
    %624 = vmatpush1.msra.mxu0 %v623
    %625 = vmatprep.subr.mxu0 0.0
    %v626 = vand.u32 %v88, 4294901760
    %v627 = vsub.f32 %v88, %v626
    %628 = vmatpush1.msra.mxu0 %v627
    %629 = vmatprep.subr.mxu0 0.0
    %v630 = vand.u32 %v89, 4294901760
    %v631 = vsub.f32 %v89, %v630
    %632 = vmatpush1.msra.mxu0 %v631
    %633 = vmatprep.subr.mxu0 0.0
    %v634 = vand.u32 %v90, 4294901760
    %v635 = vsub.f32 %v90, %v634
    %636 = vmatpush1.msra.mxu0 %v635
    %637 = vmatprep.subr.mxu0 0.0
    %638 = vmatpush1.msra.mxu0 0.0
    %639 = vmatprep.subr.mxu0 0.0
    %640 = vmatpush1.msra.mxu0 0.0
    %641 = vmatprep.subr.mxu0 0.0
    %642 = vmatpush1.msra.mxu0 0.0
    %643 = vmatprep.subr.mxu0 0.0
    %644 = vmatpush1.msra.mxu0 0.0
    %645 = vmatprep.subr.mxu0 0.0
    %646 = vmatpush1.msra.mxu0 0.0
    %647 = vmatprep.subr.mxu0 0.0
    %648 = vmatpush1.msra.mxu0 0.0
    %649 = vmatprep.subr.mxu0 0.0
    %650 = vmatpush1.msra.mxu0 0.0
    %651 = vmatprep.subr.mxu0 0.0
    %652 = vmatpush1.msra.mxu0 0.0
    %653 = vmatprep.subr.mxu0 0.0
    %654 = vmatpush1.msra.mxu0 0.0
    %655 = vmatprep.subr.mxu0 0.0
    %656 = vmatpush1.msra.mxu0 0.0
    %657 = vmatprep.subr.mxu0 0.0
    %658 = vmatpush1.msra.mxu0 0.0
    %659 = vmatprep.subr.mxu0 0.0
    %660 = vmatpush1.msra.mxu0 0.0
    %661 = vmatprep.subr.mxu0 0.0
    %662 = vmatpush1.msra.mxu0 0.0
    %663 = vmatprep.subr.mxu0 0.0
    %664 = vmatpush1.msra.mxu0 0.0
    %665 = vmatprep.subr.mxu0 0.0
    %666 = vmatpush1.msra.mxu0 0.0
    %667 = vmatprep.subr.mxu0 0.0
    %668 = vmatpush1.msra.mxu0 0.0
    %669 = vmatprep.mubr.f32.mxu0 0.0
    %v670 = vand.u32 %v59, 4294901760
    %v671 = vsub.f32 %v59, %v670
    %672 = vmatmul.mubr.f32.gmra.mrb[0].mxu0 %v671
    %v673 = vpop.f32.mrb[0].mxu0
    %v674 = vadd.f32 %v480, %v673
    %v675 = vpop.f32.mrb[0].mxu0
    %676 = vmatprep.mubr.f32.mxu0 0.0
    %v677 = vand.u32 %v60, 4294901760
    %v678 = vsub.f32 %v60, %v677
    %679 = vmatmul.mubr.f32.gmra.mrb[0].mxu0 %v678
    %v680 = vpop.f32.mrb[0].mxu0
    %v681 = vadd.f32 %v486, %v680
    %v682 = vpop.f32.mrb[0].mxu0
    %683 = vmatprep.mubr.f32.mxu0 0.0
    %v684 = vand.u32 %v61, 4294901760
    %v685 = vsub.f32 %v61, %v684
    %686 = vmatmul.mubr.f32.gmra.mrb[0].mxu0 %v685
    %v687 = vpop.f32.mrb[0].mxu0
    %v688 = vadd.f32 %v492, %v687
    %v689 = vpop.f32.mrb[0].mxu0
    %690 = vmatprep.mubr.f32.mxu0 0.0
    %v691 = vand.u32 %v62, 4294901760
    %v692 = vsub.f32 %v62, %v691
    %693 = vmatmul.mubr.f32.gmra.mrb[0].mxu0 %v692
    %v694 = vpop.f32.mrb[0].mxu0
    %v695 = vadd.f32 %v498, %v694
    %v696 = vpop.f32.mrb[0].mxu0
    %697 = vmatprep.mubr.f32.mxu0 0.0
    %v698 = vand.u32 %v63, 4294901760
    %v699 = vsub.f32 %v63, %v698
    %700 = vmatmul.mubr.f32.gmra.mrb[0].mxu0 %v699
    %v701 = vpop.f32.mrb[0].mxu0
    %v702 = vadd.f32 %v504, %v701
    %v703 = vpop.f32.mrb[0].mxu0
    %704 = vmatprep.mubr.f32.mxu0 0.0
    %v705 = vand.u32 %v64, 4294901760
    %v706 = vsub.f32 %v64, %v705
    %707 = vmatmul.mubr.f32.gmra.mrb[0].mxu0 %v706
    %v708 = vpop.f32.mrb[0].mxu0
    %v709 = vadd.f32 %v510, %v708
    %v710 = vpop.f32.mrb[0].mxu0
    %711 = vmatprep.mubr.f32.mxu0 0.0
    %v712 = vand.u32 %v65, 4294901760
    %v713 = vsub.f32 %v65, %v712
    %714 = vmatmul.mubr.f32.gmra.mrb[0].mxu0 %v713
    %v715 = vpop.f32.mrb[0].mxu0
    %v716 = vadd.f32 %v516, %v715
    %v717 = vpop.f32.mrb[0].mxu0
    %718 = vmatprep.mubr.f32.mxu0 0.0
    %v719 = vand.u32 %v66, 4294901760
    %v720 = vsub.f32 %v66, %v719
    %721 = vmatmul.mubr.f32.gmra.mrb[0].mxu0 %v720
    %v722 = vpop.f32.mrb[0].mxu0
    %v723 = vadd.f32 %v522, %v722
    %v724 = vpop.f32.mrb[0].mxu0
    %725 = vmatprep.mubr.f32.mxu0 0.0
    %v726 = vand.u32 %v67, 4294901760
    %v727 = vsub.f32 %v67, %v726
    %728 = vmatmul.mubr.f32.gmra.mrb[0].mxu0 %v727
    %v729 = vpop.f32.mrb[0].mxu0
    %v730 = vadd.f32 %v528, %v729
    %v731 = vpop.f32.mrb[0].mxu0
    %732 = vmatprep.mubr.f32.mxu0 0.0
    %v733 = vand.u32 %v68, 4294901760
    %v734 = vsub.f32 %v68, %v733
    %735 = vmatmul.mubr.f32.gmra.mrb[0].mxu0 %v734
    %v736 = vpop.f32.mrb[0].mxu0
    %v737 = vadd.f32 %v534, %v736
    %v738 = vpop.f32.mrb[0].mxu0
    %739 = vmatprep.mubr.f32.mxu0 0.0
    %v740 = vand.u32 %v69, 4294901760
    %v741 = vsub.f32 %v69, %v740
    %742 = vmatmul.mubr.f32.gmra.mrb[0].mxu0 %v741
    %v743 = vpop.f32.mrb[0].mxu0
    %v744 = vadd.f32 %v540, %v743
    %v745 = vpop.f32.mrb[0].mxu0
    %746 = vmatprep.mubr.f32.mxu0 0.0
    %v747 = vand.u32 %v70, 4294901760
    %v748 = vsub.f32 %v70, %v747
    %749 = vmatmul.mubr.f32.gmra.mrb[0].mxu0 %v748
    %v750 = vpop.f32.mrb[0].mxu0
    %v751 = vadd.f32 %v546, %v750
    %v752 = vpop.f32.mrb[0].mxu0
    %753 = vmatprep.mubr.f32.mxu0 0.0
    %v754 = vand.u32 %v71, 4294901760
    %v755 = vsub.f32 %v71, %v754
    %756 = vmatmul.mubr.f32.gmra.mrb[0].mxu0 %v755
    %v757 = vpop.f32.mrb[0].mxu0
    %v758 = vadd.f32 %v552, %v757
    %v759 = vpop.f32.mrb[0].mxu0
    %760 = vmatprep.mubr.f32.mxu0 0.0
    %v761 = vand.u32 %v72, 4294901760
    %v762 = vsub.f32 %v72, %v761
    %763 = vmatmul.mubr.f32.gmra.mrb[0].mxu0 %v762
    %v764 = vpop.f32.mrb[0].mxu0
    %v765 = vadd.f32 %v558, %v764
    %v766 = vpop.f32.mrb[0].mxu0
    %767 = vmatprep.mubr.f32.mxu0 0.0
    %v768 = vand.u32 %v73, 4294901760
    %v769 = vsub.f32 %v73, %v768
    %770 = vmatmul.mubr.f32.gmra.mrb[0].mxu0 %v769
    %v771 = vpop.f32.mrb[0].mxu0
    %v772 = vadd.f32 %v564, %v771
    %v773 = vpop.f32.mrb[0].mxu0
    %774 = vmatprep.mubr.f32.mxu0 0.0
    %v775 = vand.u32 %v74, 4294901760
    %v776 = vsub.f32 %v74, %v775
    %777 = vmatmul.mubr.f32.gmra.mrb[0].mxu0 %v776
    %v778 = vpop.f32.mrb[0].mxu0
    %v779 = vadd.f32 %v570, %v778
    %v780 = vpop.f32.mrb[0].mxu0
    %781 = vdwg.mxu0
    %782 = vmatprep.subr.mxu0 0.0
    %v783 = vand.u32 %v75, 4294901760
    %784 = vmatpush1.msra.mxu0 %v783
    %785 = vmatprep.subr.mxu0 0.0
    %v786 = vand.u32 %v76, 4294901760
    %787 = vmatpush1.msra.mxu0 %v786
    %788 = vmatprep.subr.mxu0 0.0
    %v789 = vand.u32 %v77, 4294901760
    %790 = vmatpush1.msra.mxu0 %v789
    %791 = vmatprep.subr.mxu0 0.0
    %v792 = vand.u32 %v78, 4294901760
    %793 = vmatpush1.msra.mxu0 %v792
    %794 = vmatprep.subr.mxu0 0.0
    %v795 = vand.u32 %v79, 4294901760
    %796 = vmatpush1.msra.mxu0 %v795
    %797 = vmatprep.subr.mxu0 0.0
    %v798 = vand.u32 %v80, 4294901760
    %799 = vmatpush1.msra.mxu0 %v798
    %800 = vmatprep.subr.mxu0 0.0
    %v801 = vand.u32 %v81, 4294901760
    %802 = vmatpush1.msra.mxu0 %v801
    %803 = vmatprep.subr.mxu0 0.0
    %v804 = vand.u32 %v82, 4294901760
    %805 = vmatpush1.msra.mxu0 %v804
    %806 = vmatprep.subr.mxu0 0.0
    %v807 = vand.u32 %v83, 4294901760
    %808 = vmatpush1.msra.mxu0 %v807
    %809 = vmatprep.subr.mxu0 0.0
    %v810 = vand.u32 %v84, 4294901760
    %811 = vmatpush1.msra.mxu0 %v810
    %812 = vmatprep.subr.mxu0 0.0
    %v813 = vand.u32 %v85, 4294901760
    %814 = vmatpush1.msra.mxu0 %v813
    %815 = vmatprep.subr.mxu0 0.0
    %v816 = vand.u32 %v86, 4294901760
    %817 = vmatpush1.msra.mxu0 %v816
    %818 = vmatprep.subr.mxu0 0.0
    %v819 = vand.u32 %v87, 4294901760
    %820 = vmatpush1.msra.mxu0 %v819
    %821 = vmatprep.subr.mxu0 0.0
    %v822 = vand.u32 %v88, 4294901760
    %823 = vmatpush1.msra.mxu0 %v822
    %824 = vmatprep.subr.mxu0 0.0
    %v825 = vand.u32 %v89, 4294901760
    %826 = vmatpush1.msra.mxu0 %v825
    %827 = vmatprep.subr.mxu0 0.0
    %v828 = vand.u32 %v90, 4294901760
    %829 = vmatpush1.msra.mxu0 %v828
    %830 = vmatprep.subr.mxu0 0.0
    %831 = vmatpush1.msra.mxu0 0.0
    %832 = vmatprep.subr.mxu0 0.0
    %833 = vmatpush1.msra.mxu0 0.0
    %834 = vmatprep.subr.mxu0 0.0
    %835 = vmatpush1.msra.mxu0 0.0
    %836 = vmatprep.subr.mxu0 0.0
    %837 = vmatpush1.msra.mxu0 0.0
    %838 = vmatprep.subr.mxu0 0.0
    %839 = vmatpush1.msra.mxu0 0.0
    %840 = vmatprep.subr.mxu0 0.0
    %841 = vmatpush1.msra.mxu0 0.0
    %842 = vmatprep.subr.mxu0 0.0
    %843 = vmatpush1.msra.mxu0 0.0
    %844 = vmatprep.subr.mxu0 0.0
    %845 = vmatpush1.msra.mxu0 0.0
    %846 = vmatprep.subr.mxu0 0.0
    %847 = vmatpush1.msra.mxu0 0.0
    %848 = vmatprep.subr.mxu0 0.0
    %849 = vmatpush1.msra.mxu0 0.0
    %850 = vmatprep.subr.mxu0 0.0
    %851 = vmatpush1.msra.mxu0 0.0
    %852 = vmatprep.subr.mxu0 0.0
    %853 = vmatpush1.msra.mxu0 0.0
    %854 = vmatprep.subr.mxu0 0.0
    %855 = vmatpush1.msra.mxu0 0.0
    %856 = vmatprep.subr.mxu0 0.0
    %857 = vmatpush1.msra.mxu0 0.0
    %858 = vmatprep.subr.mxu0 0.0
    %859 = vmatpush1.msra.mxu0 0.0
    %860 = vmatprep.subr.mxu0 0.0
    %861 = vmatpush1.msra.mxu0 0.0
    %862 = vmatprep.mubr.f32.mxu0 0.0
    %v863 = vand.u32 %v59, 4294901760
    %v864 = vsub.f32 %v59, %v863
    %v865 = vand.u32 %v864, 4294901760
    %866 = vmatmul.mubr.f32.gmra.mrb[0].mxu0 %v865
    %v867 = vpop.f32.mrb[0].mxu0
    %v868 = vadd.f32 %v674, %v867
    %v869 = vpop.f32.mrb[0].mxu0
    %870 = vmatprep.mubr.f32.mxu0 0.0
    %v871 = vand.u32 %v60, 4294901760
    %v872 = vsub.f32 %v60, %v871
    %v873 = vand.u32 %v872, 4294901760
    %874 = vmatmul.mubr.f32.gmra.mrb[0].mxu0 %v873
    %v875 = vpop.f32.mrb[0].mxu0
    %v876 = vadd.f32 %v681, %v875
    %v877 = vpop.f32.mrb[0].mxu0
    %878 = vmatprep.mubr.f32.mxu0 0.0
    %v879 = vand.u32 %v61, 4294901760
    %v880 = vsub.f32 %v61, %v879
    %v881 = vand.u32 %v880, 4294901760
    %882 = vmatmul.mubr.f32.gmra.mrb[0].mxu0 %v881
    %v883 = vpop.f32.mrb[0].mxu0
    %v884 = vadd.f32 %v688, %v883
    %v885 = vpop.f32.mrb[0].mxu0
    %886 = vmatprep.mubr.f32.mxu0 0.0
    %v887 = vand.u32 %v62, 4294901760
    %v888 = vsub.f32 %v62, %v887
    %v889 = vand.u32 %v888, 4294901760
    %890 = vmatmul.mubr.f32.gmra.mrb[0].mxu0 %v889
    %v891 = vpop.f32.mrb[0].mxu0
    %v892 = vadd.f32 %v695, %v891
    %v893 = vpop.f32.mrb[0].mxu0
    %894 = vmatprep.mubr.f32.mxu0 0.0
    %v895 = vand.u32 %v63, 4294901760
    %v896 = vsub.f32 %v63, %v895
    %v897 = vand.u32 %v896, 4294901760
    %898 = vmatmul.mubr.f32.gmra.mrb[0].mxu0 %v897
    %v899 = vpop.f32.mrb[0].mxu0
    %v900 = vadd.f32 %v702, %v899
    %v901 = vpop.f32.mrb[0].mxu0
    %902 = vmatprep.mubr.f32.mxu0 0.0
    %v903 = vand.u32 %v64, 4294901760
    %v904 = vsub.f32 %v64, %v903
    %v905 = vand.u32 %v904, 4294901760
    %906 = vmatmul.mubr.f32.gmra.mrb[0].mxu0 %v905
    %v907 = vpop.f32.mrb[0].mxu0
    %v908 = vadd.f32 %v709, %v907
    %v909 = vpop.f32.mrb[0].mxu0
    %910 = vmatprep.mubr.f32.mxu0 0.0
    %v911 = vand.u32 %v65, 4294901760
    %v912 = vsub.f32 %v65, %v911
    %v913 = vand.u32 %v912, 4294901760
    %914 = vmatmul.mubr.f32.gmra.mrb[0].mxu0 %v913
    %v915 = vpop.f32.mrb[0].mxu0
    %v916 = vadd.f32 %v716, %v915
    %v917 = vpop.f32.mrb[0].mxu0
    %918 = vmatprep.mubr.f32.mxu0 0.0
    %v919 = vand.u32 %v66, 4294901760
    %v920 = vsub.f32 %v66, %v919
    %v921 = vand.u32 %v920, 4294901760
    %922 = vmatmul.mubr.f32.gmra.mrb[0].mxu0 %v921
    %v923 = vpop.f32.mrb[0].mxu0
    %v924 = vadd.f32 %v723, %v923
    %v925 = vpop.f32.mrb[0].mxu0
    %926 = vmatprep.mubr.f32.mxu0 0.0
    %v927 = vand.u32 %v67, 4294901760
    %v928 = vsub.f32 %v67, %v927
    %v929 = vand.u32 %v928, 4294901760
    %930 = vmatmul.mubr.f32.gmra.mrb[0].mxu0 %v929
    %v931 = vpop.f32.mrb[0].mxu0
    %v932 = vadd.f32 %v730, %v931
    %v933 = vpop.f32.mrb[0].mxu0
    %934 = vmatprep.mubr.f32.mxu0 0.0
    %v935 = vand.u32 %v68, 4294901760
    %v936 = vsub.f32 %v68, %v935
    %v937 = vand.u32 %v936, 4294901760
    %938 = vmatmul.mubr.f32.gmra.mrb[0].mxu0 %v937
    %v939 = vpop.f32.mrb[0].mxu0
    %v940 = vadd.f32 %v737, %v939
    %v941 = vpop.f32.mrb[0].mxu0
    %942 = vmatprep.mubr.f32.mxu0 0.0
    %v943 = vand.u32 %v69, 4294901760
    %v944 = vsub.f32 %v69, %v943
    %v945 = vand.u32 %v944, 4294901760
    %946 = vmatmul.mubr.f32.gmra.mrb[0].mxu0 %v945
    %v947 = vpop.f32.mrb[0].mxu0
    %v948 = vadd.f32 %v744, %v947
    %v949 = vpop.f32.mrb[0].mxu0
    %950 = vmatprep.mubr.f32.mxu0 0.0
    %v951 = vand.u32 %v70, 4294901760
    %v952 = vsub.f32 %v70, %v951
    %v953 = vand.u32 %v952, 4294901760
    %954 = vmatmul.mubr.f32.gmra.mrb[0].mxu0 %v953
    %v955 = vpop.f32.mrb[0].mxu0
    %v956 = vadd.f32 %v751, %v955
    %v957 = vpop.f32.mrb[0].mxu0
    %958 = vmatprep.mubr.f32.mxu0 0.0
    %v959 = vand.u32 %v71, 4294901760
    %v960 = vsub.f32 %v71, %v959
    %v961 = vand.u32 %v960, 4294901760
    %962 = vmatmul.mubr.f32.gmra.mrb[0].mxu0 %v961
    %v963 = vpop.f32.mrb[0].mxu0
    %v964 = vadd.f32 %v758, %v963
    %v965 = vpop.f32.mrb[0].mxu0
    %966 = vmatprep.mubr.f32.mxu0 0.0
    %v967 = vand.u32 %v72, 4294901760
    %v968 = vsub.f32 %v72, %v967
    %v969 = vand.u32 %v968, 4294901760
    %970 = vmatmul.mubr.f32.gmra.mrb[0].mxu0 %v969
    %v971 = vpop.f32.mrb[0].mxu0
    %v972 = vadd.f32 %v765, %v971
    %v973 = vpop.f32.mrb[0].mxu0
    %974 = vmatprep.mubr.f32.mxu0 0.0
    %v975 = vand.u32 %v73, 4294901760
    %v976 = vsub.f32 %v73, %v975
    %v977 = vand.u32 %v976, 4294901760
    %978 = vmatmul.mubr.f32.gmra.mrb[0].mxu0 %v977
    %v979 = vpop.f32.mrb[0].mxu0
    %v980 = vadd.f32 %v772, %v979
    %v981 = vpop.f32.mrb[0].mxu0
    %982 = vmatprep.mubr.f32.mxu0 0.0
    %v983 = vand.u32 %v74, 4294901760
    %v984 = vsub.f32 %v74, %v983
    %v985 = vand.u32 %v984, 4294901760
    %986 = vmatmul.mubr.f32.gmra.mrb[0].mxu0 %v985
    %v987 = vpop.f32.mrb[0].mxu0
    %v988 = vadd.f32 %v779, %v987
    %v989 = vpop.f32.mrb[0].mxu0
    %990 = vdwg.mxu0
    %991 = vmatprep.subr.mxu0 0.0
    %v992 = vand.u32 %v75, 4294901760
    %v993 = vsub.f32 %v75, %v992
    %v994 = vand.u32 %v993, 4294901760
    %995 = vmatpush1.msra.mxu0 %v994
    %996 = vmatprep.subr.mxu0 0.0
    %v997 = vand.u32 %v76, 4294901760
    %v998 = vsub.f32 %v76, %v997
    %v999 = vand.u32 %v998, 4294901760
    %1000 = vmatpush1.msra.mxu0 %v999
    %1001 = vmatprep.subr.mxu0 0.0
    %v1002 = vand.u32 %v77, 4294901760
    %v1003 = vsub.f32 %v77, %v1002
    %v1004 = vand.u32 %v1003, 4294901760
    %1005 = vmatpush1.msra.mxu0 %v1004
    %1006 = vmatprep.subr.mxu0 0.0
    %v1007 = vand.u32 %v78, 4294901760
    %v1008 = vsub.f32 %v78, %v1007
    %v1009 = vand.u32 %v1008, 4294901760
    %1010 = vmatpush1.msra.mxu0 %v1009
    %1011 = vmatprep.subr.mxu0 0.0
    %v1012 = vand.u32 %v79, 4294901760
    %v1013 = vsub.f32 %v79, %v1012
    %v1014 = vand.u32 %v1013, 4294901760
    %1015 = vmatpush1.msra.mxu0 %v1014
    %1016 = vmatprep.subr.mxu0 0.0
    %v1017 = vand.u32 %v80, 4294901760
    %v1018 = vsub.f32 %v80, %v1017
    %v1019 = vand.u32 %v1018, 4294901760
    %1020 = vmatpush1.msra.mxu0 %v1019
    %1021 = vmatprep.subr.mxu0 0.0
    %v1022 = vand.u32 %v81, 4294901760
    %v1023 = vsub.f32 %v81, %v1022
    %v1024 = vand.u32 %v1023, 4294901760
    %1025 = vmatpush1.msra.mxu0 %v1024
    %1026 = vmatprep.subr.mxu0 0.0
    %v1027 = vand.u32 %v82, 4294901760
    %v1028 = vsub.f32 %v82, %v1027
    %v1029 = vand.u32 %v1028, 4294901760
    %1030 = vmatpush1.msra.mxu0 %v1029
    %1031 = vmatprep.subr.mxu0 0.0
    %v1032 = vand.u32 %v83, 4294901760
    %v1033 = vsub.f32 %v83, %v1032
    %v1034 = vand.u32 %v1033, 4294901760
    %1035 = vmatpush1.msra.mxu0 %v1034
    %1036 = vmatprep.subr.mxu0 0.0
    %v1037 = vand.u32 %v84, 4294901760
    %v1038 = vsub.f32 %v84, %v1037
    %v1039 = vand.u32 %v1038, 4294901760
    %1040 = vmatpush1.msra.mxu0 %v1039
    %1041 = vmatprep.subr.mxu0 0.0
    %v1042 = vand.u32 %v85, 4294901760
    %v1043 = vsub.f32 %v85, %v1042
    %v1044 = vand.u32 %v1043, 4294901760
    %1045 = vmatpush1.msra.mxu0 %v1044
    %1046 = vmatprep.subr.mxu0 0.0
    %v1047 = vand.u32 %v86, 4294901760
    %v1048 = vsub.f32 %v86, %v1047
    %v1049 = vand.u32 %v1048, 4294901760
    %1050 = vmatpush1.msra.mxu0 %v1049
    %1051 = vmatprep.subr.mxu0 0.0
    %v1052 = vand.u32 %v87, 4294901760
    %v1053 = vsub.f32 %v87, %v1052
    %v1054 = vand.u32 %v1053, 4294901760
    %1055 = vmatpush1.msra.mxu0 %v1054
    %1056 = vmatprep.subr.mxu0 0.0
    %v1057 = vand.u32 %v88, 4294901760
    %v1058 = vsub.f32 %v88, %v1057
    %v1059 = vand.u32 %v1058, 4294901760
    %1060 = vmatpush1.msra.mxu0 %v1059
    %1061 = vmatprep.subr.mxu0 0.0
    %v1062 = vand.u32 %v89, 4294901760
    %v1063 = vsub.f32 %v89, %v1062
    %v1064 = vand.u32 %v1063, 4294901760
    %1065 = vmatpush1.msra.mxu0 %v1064
    %1066 = vmatprep.subr.mxu0 0.0
    %v1067 = vand.u32 %v90, 4294901760
    %v1068 = vsub.f32 %v90, %v1067
    %v1069 = vand.u32 %v1068, 4294901760
    %1070 = vmatpush1.msra.mxu0 %v1069
    %1071 = vmatprep.subr.mxu0 0.0
    %1072 = vmatpush1.msra.mxu0 0.0
    %1073 = vmatprep.subr.mxu0 0.0
    %1074 = vmatpush1.msra.mxu0 0.0
    %1075 = vmatprep.subr.mxu0 0.0
    %1076 = vmatpush1.msra.mxu0 0.0
    %1077 = vmatprep.subr.mxu0 0.0
    %1078 = vmatpush1.msra.mxu0 0.0
    %1079 = vmatprep.subr.mxu0 0.0
    %1080 = vmatpush1.msra.mxu0 0.0
    %1081 = vmatprep.subr.mxu0 0.0
    %1082 = vmatpush1.msra.mxu0 0.0
    %1083 = vmatprep.subr.mxu0 0.0
    %1084 = vmatpush1.msra.mxu0 0.0
    %1085 = vmatprep.subr.mxu0 0.0
    %1086 = vmatpush1.msra.mxu0 0.0
    %1087 = vmatprep.subr.mxu0 0.0
    %1088 = vmatpush1.msra.mxu0 0.0
    %1089 = vmatprep.subr.mxu0 0.0
    %1090 = vmatpush1.msra.mxu0 0.0
    %1091 = vmatprep.subr.mxu0 0.0
    %1092 = vmatpush1.msra.mxu0 0.0
    %1093 = vmatprep.subr.mxu0 0.0
    %1094 = vmatpush1.msra.mxu0 0.0
    %1095 = vmatprep.subr.mxu0 0.0
    %1096 = vmatpush1.msra.mxu0 0.0
    %1097 = vmatprep.subr.mxu0 0.0
    %1098 = vmatpush1.msra.mxu0 0.0
    %1099 = vmatprep.subr.mxu0 0.0
    %1100 = vmatpush1.msra.mxu0 0.0
    %1101 = vmatprep.subr.mxu0 0.0
    %1102 = vmatpush1.msra.mxu0 0.0
    %1103 = vmatprep.mubr.f32.mxu0 0.0
    %v1104 = vand.u32 %v59, 4294901760
    %1105 = vmatmul.mubr.f32.gmra.mrb[0].mxu0 %v1104
    %v1106 = vpop.f32.mrb[0].mxu0
    %v1107 = vadd.f32 %v868, %v1106
    %v1108 = vpop.f32.mrb[0].mxu0
    %1109 = vmatprep.mubr.f32.mxu0 0.0
    %v1110 = vand.u32 %v60, 4294901760
    %1111 = vmatmul.mubr.f32.gmra.mrb[0].mxu0 %v1110
    %v1112 = vpop.f32.mrb[0].mxu0
    %v1113 = vadd.f32 %v876, %v1112
    %v1114 = vpop.f32.mrb[0].mxu0
    %1115 = vmatprep.mubr.f32.mxu0 0.0
    %v1116 = vand.u32 %v61, 4294901760
    %1117 = vmatmul.mubr.f32.gmra.mrb[0].mxu0 %v1116
    %v1118 = vpop.f32.mrb[0].mxu0
    %v1119 = vadd.f32 %v884, %v1118
    %v1120 = vpop.f32.mrb[0].mxu0
    %1121 = vmatprep.mubr.f32.mxu0 0.0
    %v1122 = vand.u32 %v62, 4294901760
    %1123 = vmatmul.mubr.f32.gmra.mrb[0].mxu0 %v1122
    %v1124 = vpop.f32.mrb[0].mxu0
    %v1125 = vadd.f32 %v892, %v1124
    %v1126 = vpop.f32.mrb[0].mxu0
    %1127 = vmatprep.mubr.f32.mxu0 0.0
    %v1128 = vand.u32 %v63, 4294901760
    %1129 = vmatmul.mubr.f32.gmra.mrb[0].mxu0 %v1128
    %v1130 = vpop.f32.mrb[0].mxu0
    %v1131 = vadd.f32 %v900, %v1130
    %v1132 = vpop.f32.mrb[0].mxu0
    %1133 = vmatprep.mubr.f32.mxu0 0.0
    %v1134 = vand.u32 %v64, 4294901760
    %1135 = vmatmul.mubr.f32.gmra.mrb[0].mxu0 %v1134
    %v1136 = vpop.f32.mrb[0].mxu0
    %v1137 = vadd.f32 %v908, %v1136
    %v1138 = vpop.f32.mrb[0].mxu0
    %1139 = vmatprep.mubr.f32.mxu0 0.0
    %v1140 = vand.u32 %v65, 4294901760
    %1141 = vmatmul.mubr.f32.gmra.mrb[0].mxu0 %v1140
    %v1142 = vpop.f32.mrb[0].mxu0
    %v1143 = vadd.f32 %v916, %v1142
    %v1144 = vpop.f32.mrb[0].mxu0
    %1145 = vmatprep.mubr.f32.mxu0 0.0
    %v1146 = vand.u32 %v66, 4294901760
    %1147 = vmatmul.mubr.f32.gmra.mrb[0].mxu0 %v1146
    %v1148 = vpop.f32.mrb[0].mxu0
    %v1149 = vadd.f32 %v924, %v1148
    %v1150 = vpop.f32.mrb[0].mxu0
    %1151 = vmatprep.mubr.f32.mxu0 0.0
    %v1152 = vand.u32 %v67, 4294901760
    %1153 = vmatmul.mubr.f32.gmra.mrb[0].mxu0 %v1152
    %v1154 = vpop.f32.mrb[0].mxu0
    %v1155 = vadd.f32 %v932, %v1154
    %v1156 = vpop.f32.mrb[0].mxu0
    %1157 = vmatprep.mubr.f32.mxu0 0.0
    %v1158 = vand.u32 %v68, 4294901760
    %1159 = vmatmul.mubr.f32.gmra.mrb[0].mxu0 %v1158
    %v1160 = vpop.f32.mrb[0].mxu0
    %v1161 = vadd.f32 %v940, %v1160
    %v1162 = vpop.f32.mrb[0].mxu0
    %1163 = vmatprep.mubr.f32.mxu0 0.0
    %v1164 = vand.u32 %v69, 4294901760
    %1165 = vmatmul.mubr.f32.gmra.mrb[0].mxu0 %v1164
    %v1166 = vpop.f32.mrb[0].mxu0
    %v1167 = vadd.f32 %v948, %v1166
    %v1168 = vpop.f32.mrb[0].mxu0
    %1169 = vmatprep.mubr.f32.mxu0 0.0
    %v1170 = vand.u32 %v70, 4294901760
    %1171 = vmatmul.mubr.f32.gmra.mrb[0].mxu0 %v1170
    %v1172 = vpop.f32.mrb[0].mxu0
    %v1173 = vadd.f32 %v956, %v1172
    %v1174 = vpop.f32.mrb[0].mxu0
    %1175 = vmatprep.mubr.f32.mxu0 0.0
    %v1176 = vand.u32 %v71, 4294901760
    %1177 = vmatmul.mubr.f32.gmra.mrb[0].mxu0 %v1176
    %v1178 = vpop.f32.mrb[0].mxu0
    %v1179 = vadd.f32 %v964, %v1178
    %v1180 = vpop.f32.mrb[0].mxu0
    %1181 = vmatprep.mubr.f32.mxu0 0.0
    %v1182 = vand.u32 %v72, 4294901760
    %1183 = vmatmul.mubr.f32.gmra.mrb[0].mxu0 %v1182
    %v1184 = vpop.f32.mrb[0].mxu0
    %v1185 = vadd.f32 %v972, %v1184
    %v1186 = vpop.f32.mrb[0].mxu0
    %1187 = vmatprep.mubr.f32.mxu0 0.0
    %v1188 = vand.u32 %v73, 4294901760
    %1189 = vmatmul.mubr.f32.gmra.mrb[0].mxu0 %v1188
    %v1190 = vpop.f32.mrb[0].mxu0
    %v1191 = vadd.f32 %v980, %v1190
    %v1192 = vpop.f32.mrb[0].mxu0
    %1193 = vmatprep.mubr.f32.mxu0 0.0
    %v1194 = vand.u32 %v74, 4294901760
    %1195 = vmatmul.mubr.f32.gmra.mrb[0].mxu0 %v1194
    %v1196 = vpop.f32.mrb[0].mxu0
    %v1197 = vadd.f32 %v988, %v1196
    %v1198 = vpop.f32.mrb[0].mxu0
    %1199 = vdwg.mxu0
    %1200 = vmatprep.subr.mxu0 0.0
    %v1201 = vand.u32 %v75, 4294901760
    %1202 = vmatpush1.msra.mxu0 %v1201
    %1203 = vmatprep.subr.mxu0 0.0
    %v1204 = vand.u32 %v76, 4294901760
    %1205 = vmatpush1.msra.mxu0 %v1204
    %1206 = vmatprep.subr.mxu0 0.0
    %v1207 = vand.u32 %v77, 4294901760
    %1208 = vmatpush1.msra.mxu0 %v1207
    %1209 = vmatprep.subr.mxu0 0.0
    %v1210 = vand.u32 %v78, 4294901760
    %1211 = vmatpush1.msra.mxu0 %v1210
    %1212 = vmatprep.subr.mxu0 0.0
    %v1213 = vand.u32 %v79, 4294901760
    %1214 = vmatpush1.msra.mxu0 %v1213
    %1215 = vmatprep.subr.mxu0 0.0
    %v1216 = vand.u32 %v80, 4294901760
    %1217 = vmatpush1.msra.mxu0 %v1216
    %1218 = vmatprep.subr.mxu0 0.0
    %v1219 = vand.u32 %v81, 4294901760
    %1220 = vmatpush1.msra.mxu0 %v1219
    %1221 = vmatprep.subr.mxu0 0.0
    %v1222 = vand.u32 %v82, 4294901760
    %1223 = vmatpush1.msra.mxu0 %v1222
    %1224 = vmatprep.subr.mxu0 0.0
    %v1225 = vand.u32 %v83, 4294901760
    %1226 = vmatpush1.msra.mxu0 %v1225
    %1227 = vmatprep.subr.mxu0 0.0
    %v1228 = vand.u32 %v84, 4294901760
    %1229 = vmatpush1.msra.mxu0 %v1228
    %1230 = vmatprep.subr.mxu0 0.0
    %v1231 = vand.u32 %v85, 4294901760
    %1232 = vmatpush1.msra.mxu0 %v1231
    %1233 = vmatprep.subr.mxu0 0.0
    %v1234 = vand.u32 %v86, 4294901760
    %1235 = vmatpush1.msra.mxu0 %v1234
    %1236 = vmatprep.subr.mxu0 0.0
    %v1237 = vand.u32 %v87, 4294901760
    %1238 = vmatpush1.msra.mxu0 %v1237
    %1239 = vmatprep.subr.mxu0 0.0
    %v1240 = vand.u32 %v88, 4294901760
    %1241 = vmatpush1.msra.mxu0 %v1240
    %1242 = vmatprep.subr.mxu0 0.0
    %v1243 = vand.u32 %v89, 4294901760
    %1244 = vmatpush1.msra.mxu0 %v1243
    %1245 = vmatprep.subr.mxu0 0.0
    %v1246 = vand.u32 %v90, 4294901760
    %1247 = vmatpush1.msra.mxu0 %v1246
    %1248 = vmatprep.subr.mxu0 0.0
    %1249 = vmatpush1.msra.mxu0 0.0
    %1250 = vmatprep.subr.mxu0 0.0
    %1251 = vmatpush1.msra.mxu0 0.0
    %1252 = vmatprep.subr.mxu0 0.0
    %1253 = vmatpush1.msra.mxu0 0.0
    %1254 = vmatprep.subr.mxu0 0.0
    %1255 = vmatpush1.msra.mxu0 0.0
    %1256 = vmatprep.subr.mxu0 0.0
    %1257 = vmatpush1.msra.mxu0 0.0
    %1258 = vmatprep.subr.mxu0 0.0
    %1259 = vmatpush1.msra.mxu0 0.0
    %1260 = vmatprep.subr.mxu0 0.0
    %1261 = vmatpush1.msra.mxu0 0.0
    %1262 = vmatprep.subr.mxu0 0.0
    %1263 = vmatpush1.msra.mxu0 0.0
    %1264 = vmatprep.subr.mxu0 0.0
    %1265 = vmatpush1.msra.mxu0 0.0
    %1266 = vmatprep.subr.mxu0 0.0
    %1267 = vmatpush1.msra.mxu0 0.0
    %1268 = vmatprep.subr.mxu0 0.0
    %1269 = vmatpush1.msra.mxu0 0.0
    %1270 = vmatprep.subr.mxu0 0.0
    %1271 = vmatpush1.msra.mxu0 0.0
    %1272 = vmatprep.subr.mxu0 0.0
    %1273 = vmatpush1.msra.mxu0 0.0
    %1274 = vmatprep.subr.mxu0 0.0
    %1275 = vmatpush1.msra.mxu0 0.0
    %1276 = vmatprep.subr.mxu0 0.0
    %1277 = vmatpush1.msra.mxu0 0.0
    %1278 = vmatprep.subr.mxu0 0.0
    %1279 = vmatpush1.msra.mxu0 0.0
    %1280 = vmatprep.mubr.f32.mxu0 0.0
    %v1281 = vand.u32 %v59, 4294901760
    %1282 = vmatmul.mubr.f32.gmra.mrb[0].mxu0 %v1281
    %v1283 = vpop.f32.mrb[0].mxu0
    %v1284 = vadd.f32 %v1107, %v1283
    %v1285 = vpop.f32.mrb[0].mxu0
    %1286 = vmatprep.mubr.f32.mxu0 0.0
    %v1287 = vand.u32 %v60, 4294901760
    %1288 = vmatmul.mubr.f32.gmra.mrb[0].mxu0 %v1287
    %v1289 = vpop.f32.mrb[0].mxu0
    %v1290 = vadd.f32 %v1113, %v1289
    %v1291 = vpop.f32.mrb[0].mxu0
    %1292 = vmatprep.mubr.f32.mxu0 0.0
    %v1293 = vand.u32 %v61, 4294901760
    %1294 = vmatmul.mubr.f32.gmra.mrb[0].mxu0 %v1293
    %v1295 = vpop.f32.mrb[0].mxu0
    %v1296 = vadd.f32 %v1119, %v1295
    %v1297 = vpop.f32.mrb[0].mxu0
    %1298 = vmatprep.mubr.f32.mxu0 0.0
    %v1299 = vand.u32 %v62, 4294901760
    %1300 = vmatmul.mubr.f32.gmra.mrb[0].mxu0 %v1299
    %v1301 = vpop.f32.mrb[0].mxu0
    %v1302 = vadd.f32 %v1125, %v1301
    %v1303 = vpop.f32.mrb[0].mxu0
    %1304 = vmatprep.mubr.f32.mxu0 0.0
    %v1305 = vand.u32 %v63, 4294901760
    %1306 = vmatmul.mubr.f32.gmra.mrb[0].mxu0 %v1305
    %v1307 = vpop.f32.mrb[0].mxu0
    %v1308 = vadd.f32 %v1131, %v1307
    %v1309 = vpop.f32.mrb[0].mxu0
    %1310 = vmatprep.mubr.f32.mxu0 0.0
    %v1311 = vand.u32 %v64, 4294901760
    %1312 = vmatmul.mubr.f32.gmra.mrb[0].mxu0 %v1311
    %v1313 = vpop.f32.mrb[0].mxu0
    %v1314 = vadd.f32 %v1137, %v1313
    %v1315 = vpop.f32.mrb[0].mxu0
    %1316 = vmatprep.mubr.f32.mxu0 0.0
    %v1317 = vand.u32 %v65, 4294901760
    %1318 = vmatmul.mubr.f32.gmra.mrb[0].mxu0 %v1317
    %v1319 = vpop.f32.mrb[0].mxu0
    %v1320 = vadd.f32 %v1143, %v1319
    %v1321 = vpop.f32.mrb[0].mxu0
    %1322 = vmatprep.mubr.f32.mxu0 0.0
    %v1323 = vand.u32 %v66, 4294901760
    %1324 = vmatmul.mubr.f32.gmra.mrb[0].mxu0 %v1323
    %v1325 = vpop.f32.mrb[0].mxu0
    %v1326 = vadd.f32 %v1149, %v1325
    %v1327 = vpop.f32.mrb[0].mxu0
    %1328 = vmatprep.mubr.f32.mxu0 0.0
    %v1329 = vand.u32 %v67, 4294901760
    %1330 = vmatmul.mubr.f32.gmra.mrb[0].mxu0 %v1329
    %v1331 = vpop.f32.mrb[0].mxu0
    %v1332 = vadd.f32 %v1155, %v1331
    %v1333 = vpop.f32.mrb[0].mxu0
    %1334 = vmatprep.mubr.f32.mxu0 0.0
    %v1335 = vand.u32 %v68, 4294901760
    %1336 = vmatmul.mubr.f32.gmra.mrb[0].mxu0 %v1335
    %v1337 = vpop.f32.mrb[0].mxu0
    %v1338 = vadd.f32 %v1161, %v1337
    %v1339 = vpop.f32.mrb[0].mxu0
    %1340 = vmatprep.mubr.f32.mxu0 0.0
    %v1341 = vand.u32 %v69, 4294901760
    %1342 = vmatmul.mubr.f32.gmra.mrb[0].mxu0 %v1341
    %v1343 = vpop.f32.mrb[0].mxu0
    %v1344 = vadd.f32 %v1167, %v1343
    %v1345 = vpop.f32.mrb[0].mxu0
    %1346 = vmatprep.mubr.f32.mxu0 0.0
    %v1347 = vand.u32 %v70, 4294901760
    %1348 = vmatmul.mubr.f32.gmra.mrb[0].mxu0 %v1347
    %v1349 = vpop.f32.mrb[0].mxu0
    %v1350 = vadd.f32 %v1173, %v1349
    %v1351 = vpop.f32.mrb[0].mxu0
    %1352 = vmatprep.mubr.f32.mxu0 0.0
    %v1353 = vand.u32 %v71, 4294901760
    %1354 = vmatmul.mubr.f32.gmra.mrb[0].mxu0 %v1353
    %v1355 = vpop.f32.mrb[0].mxu0
    %v1356 = vadd.f32 %v1179, %v1355
    %v1357 = vpop.f32.mrb[0].mxu0
    %1358 = vmatprep.mubr.f32.mxu0 0.0
    %v1359 = vand.u32 %v72, 4294901760
    %1360 = vmatmul.mubr.f32.gmra.mrb[0].mxu0 %v1359
    %v1361 = vpop.f32.mrb[0].mxu0
    %v1362 = vadd.f32 %v1185, %v1361
    %v1363 = vpop.f32.mrb[0].mxu0
    %1364 = vmatprep.mubr.f32.mxu0 0.0
    %v1365 = vand.u32 %v73, 4294901760
    %1366 = vmatmul.mubr.f32.gmra.mrb[0].mxu0 %v1365
    %v1367 = vpop.f32.mrb[0].mxu0
    %v1368 = vadd.f32 %v1191, %v1367
    %v1369 = vpop.f32.mrb[0].mxu0
    %1370 = vmatprep.mubr.f32.mxu0 0.0
    %v1371 = vand.u32 %v74, 4294901760
    %1372 = vmatmul.mubr.f32.gmra.mrb[0].mxu0 %v1371
    %v1373 = vpop.f32.mrb[0].mxu0
    %v1374 = vadd.f32 %v1197, %v1373
    %v1375 = vpop.f32.mrb[0].mxu0
    %1376 = vdwg.mxu0
    %v1377 = vld [vmem:[#allocation7] sm:$0xff]
    %v1378 = vld [vmem:[#allocation7 + $0x8] sm:$0xff]
    %v1379 = vld [vmem:[#allocation7 + $0x10] sm:$0xff]
    %v1380 = vld [vmem:[#allocation7 + $0x18] sm:$0xff]
    %v1381 = vld [vmem:[#allocation7 + $0x20] sm:$0xff]
    %v1382 = vld [vmem:[#allocation7 + $0x28] sm:$0xff]
    %v1383 = vld [vmem:[#allocation7 + $0x30] sm:$0xff]
    %v1384 = vld [vmem:[#allocation7 + $0x38] sm:$0xff]
    %v1385 = vld [vmem:[#allocation7 + $0x40] sm:$0xff]
    %v1386 = vld [vmem:[#allocation7 + $0x48] sm:$0xff]
    %v1387 = vld [vmem:[#allocation7 + $0x50] sm:$0xff]
    %v1388 = vld [vmem:[#allocation7 + $0x58] sm:$0xff]
    %v1389 = vld [vmem:[#allocation7 + $0x60] sm:$0xff]
    %v1390 = vld [vmem:[#allocation7 + $0x68] sm:$0xff]
    %v1391 = vld [vmem:[#allocation7 + $0x70] sm:$0xff]
    %v1392 = vld [vmem:[#allocation7 + $0x78] sm:$0xff]
    %1393 = vmatprep.subr.mxu0 0.0
    %v1394 = vand.u32 %v1377, 4294901760
    %1395 = vmatpush1.msra.mxu0 %v1394
    %1396 = vmatprep.subr.mxu0 0.0
    %v1397 = vand.u32 %v1378, 4294901760
    %1398 = vmatpush1.msra.mxu0 %v1397
    %1399 = vmatprep.subr.mxu0 0.0
    %v1400 = vand.u32 %v1379, 4294901760
    %1401 = vmatpush1.msra.mxu0 %v1400
    %1402 = vmatprep.subr.mxu0 0.0
    %v1403 = vand.u32 %v1380, 4294901760
    %1404 = vmatpush1.msra.mxu0 %v1403
    %1405 = vmatprep.subr.mxu0 0.0
    %v1406 = vand.u32 %v1381, 4294901760
    %1407 = vmatpush1.msra.mxu0 %v1406
    %1408 = vmatprep.subr.mxu0 0.0
    %v1409 = vand.u32 %v1382, 4294901760
    %1410 = vmatpush1.msra.mxu0 %v1409
    %1411 = vmatprep.subr.mxu0 0.0
    %v1412 = vand.u32 %v1383, 4294901760
    %1413 = vmatpush1.msra.mxu0 %v1412
    %1414 = vmatprep.subr.mxu0 0.0
    %v1415 = vand.u32 %v1384, 4294901760
    %1416 = vmatpush1.msra.mxu0 %v1415
    %1417 = vmatprep.subr.mxu0 0.0
    %v1418 = vand.u32 %v1385, 4294901760
    %1419 = vmatpush1.msra.mxu0 %v1418
    %1420 = vmatprep.subr.mxu0 0.0
    %v1421 = vand.u32 %v1386, 4294901760
    %1422 = vmatpush1.msra.mxu0 %v1421
    %1423 = vmatprep.subr.mxu0 0.0
    %v1424 = vand.u32 %v1387, 4294901760
    %1425 = vmatpush1.msra.mxu0 %v1424
    %1426 = vmatprep.subr.mxu0 0.0
    %v1427 = vand.u32 %v1388, 4294901760
    %1428 = vmatpush1.msra.mxu0 %v1427
    %1429 = vmatprep.subr.mxu0 0.0
    %v1430 = vand.u32 %v1389, 4294901760
    %1431 = vmatpush1.msra.mxu0 %v1430
    %1432 = vmatprep.subr.mxu0 0.0
    %v1433 = vand.u32 %v1390, 4294901760
    %1434 = vmatpush1.msra.mxu0 %v1433
    %1435 = vmatprep.subr.mxu0 0.0
    %v1436 = vand.u32 %v1391, 4294901760
    %1437 = vmatpush1.msra.mxu0 %v1436
    %1438 = vmatprep.subr.mxu0 0.0
    %v1439 = vand.u32 %v1392, 4294901760
    %1440 = vmatpush1.msra.mxu0 %v1439
    %1441 = vmatprep.subr.mxu0 0.0
    %1442 = vmatpush1.msra.mxu0 0.0
    %1443 = vmatprep.subr.mxu0 0.0
    %1444 = vmatpush1.msra.mxu0 0.0
    %1445 = vmatprep.subr.mxu0 0.0
    %1446 = vmatpush1.msra.mxu0 0.0
    %1447 = vmatprep.subr.mxu0 0.0
    %1448 = vmatpush1.msra.mxu0 0.0
    %1449 = vmatprep.subr.mxu0 0.0
    %1450 = vmatpush1.msra.mxu0 0.0
    %1451 = vmatprep.subr.mxu0 0.0
    %1452 = vmatpush1.msra.mxu0 0.0
    %1453 = vmatprep.subr.mxu0 0.0
    %1454 = vmatpush1.msra.mxu0 0.0
    %1455 = vmatprep.subr.mxu0 0.0
    %1456 = vmatpush1.msra.mxu0 0.0
    %1457 = vmatprep.subr.mxu0 0.0
    %1458 = vmatpush1.msra.mxu0 0.0
    %1459 = vmatprep.subr.mxu0 0.0
    %1460 = vmatpush1.msra.mxu0 0.0
    %1461 = vmatprep.subr.mxu0 0.0
    %1462 = vmatpush1.msra.mxu0 0.0
    %1463 = vmatprep.subr.mxu0 0.0
    %1464 = vmatpush1.msra.mxu0 0.0
    %1465 = vmatprep.subr.mxu0 0.0
    %1466 = vmatpush1.msra.mxu0 0.0
    %1467 = vmatprep.subr.mxu0 0.0
    %1468 = vmatpush1.msra.mxu0 0.0
    %1469 = vmatprep.subr.mxu0 0.0
    %1470 = vmatpush1.msra.mxu0 0.0
    %1471 = vmatprep.subr.mxu0 0.0
    %1472 = vmatpush1.msra.mxu0 0.0
    %1473 = vmatprep.mubr.f32.mxu0 0.0
    %v1474 = vand.u32 %v1284, 4294901760
    %v1475 = vsub.f32 %v1284, %v1474
    %v1476 = vand.u32 %v1475, 4294901760
    %v1477 = vsub.f32 %v1475, %v1476
    %v1478 = vand.u32 %v1477, 4294901760
    %1479 = vmatmul.mubr.f32.gmra.mrb[0].mxu0 %v1478
    %v1480 = vpop.f32.mrb[0].mxu0
    %v1481 = vadd.f32 0.0, %v1480
    %v1482 = vpop.f32.mrb[0].mxu0
    %1483 = vmatprep.mubr.f32.mxu0 0.0
    %v1484 = vand.u32 %v1290, 4294901760
    %v1485 = vsub.f32 %v1290, %v1484
    %v1486 = vand.u32 %v1485, 4294901760
    %v1487 = vsub.f32 %v1485, %v1486
    %v1488 = vand.u32 %v1487, 4294901760
    %1489 = vmatmul.mubr.f32.gmra.mrb[0].mxu0 %v1488
    %v1490 = vpop.f32.mrb[0].mxu0
    %v1491 = vadd.f32 0.0, %v1490
    %v1492 = vpop.f32.mrb[0].mxu0
    %1493 = vmatprep.mubr.f32.mxu0 0.0
    %v1494 = vand.u32 %v1296, 4294901760
    %v1495 = vsub.f32 %v1296, %v1494
    %v1496 = vand.u32 %v1495, 4294901760
    %v1497 = vsub.f32 %v1495, %v1496
    %v1498 = vand.u32 %v1497, 4294901760
    %1499 = vmatmul.mubr.f32.gmra.mrb[0].mxu0 %v1498
    %v1500 = vpop.f32.mrb[0].mxu0
    %v1501 = vadd.f32 0.0, %v1500
    %v1502 = vpop.f32.mrb[0].mxu0
    %1503 = vmatprep.mubr.f32.mxu0 0.0
    %v1504 = vand.u32 %v1302, 4294901760
    %v1505 = vsub.f32 %v1302, %v1504
    %v1506 = vand.u32 %v1505, 4294901760
    %v1507 = vsub.f32 %v1505, %v1506
    %v1508 = vand.u32 %v1507, 4294901760
    %1509 = vmatmul.mubr.f32.gmra.mrb[0].mxu0 %v1508
    %v1510 = vpop.f32.mrb[0].mxu0
    %v1511 = vadd.f32 0.0, %v1510
    %v1512 = vpop.f32.mrb[0].mxu0
    %1513 = vmatprep.mubr.f32.mxu0 0.0
    %v1514 = vand.u32 %v1308, 4294901760
    %v1515 = vsub.f32 %v1308, %v1514
    %v1516 = vand.u32 %v1515, 4294901760
    %v1517 = vsub.f32 %v1515, %v1516
    %v1518 = vand.u32 %v1517, 4294901760
    %1519 = vmatmul.mubr.f32.gmra.mrb[0].mxu0 %v1518
    %v1520 = vpop.f32.mrb[0].mxu0
    %v1521 = vadd.f32 0.0, %v1520
    %v1522 = vpop.f32.mrb[0].mxu0
    %1523 = vmatprep.mubr.f32.mxu0 0.0
    %v1524 = vand.u32 %v1314, 4294901760
    %v1525 = vsub.f32 %v1314, %v1524
    %v1526 = vand.u32 %v1525, 4294901760
    %v1527 = vsub.f32 %v1525, %v1526
    %v1528 = vand.u32 %v1527, 4294901760
    %1529 = vmatmul.mubr.f32.gmra.mrb[0].mxu0 %v1528
    %v1530 = vpop.f32.mrb[0].mxu0
    %v1531 = vadd.f32 0.0, %v1530
    %v1532 = vpop.f32.mrb[0].mxu0
    %1533 = vmatprep.mubr.f32.mxu0 0.0
    %v1534 = vand.u32 %v1320, 4294901760
    %v1535 = vsub.f32 %v1320, %v1534
    %v1536 = vand.u32 %v1535, 4294901760
    %v1537 = vsub.f32 %v1535, %v1536
    %v1538 = vand.u32 %v1537, 4294901760
    %1539 = vmatmul.mubr.f32.gmra.mrb[0].mxu0 %v1538
    %v1540 = vpop.f32.mrb[0].mxu0
    %v1541 = vadd.f32 0.0, %v1540
    %v1542 = vpop.f32.mrb[0].mxu0
    %1543 = vmatprep.mubr.f32.mxu0 0.0
    %v1544 = vand.u32 %v1326, 4294901760
    %v1545 = vsub.f32 %v1326, %v1544
    %v1546 = vand.u32 %v1545, 4294901760
    %v1547 = vsub.f32 %v1545, %v1546
    %v1548 = vand.u32 %v1547, 4294901760
    %1549 = vmatmul.mubr.f32.gmra.mrb[0].mxu0 %v1548
    %v1550 = vpop.f32.mrb[0].mxu0
    %v1551 = vadd.f32 0.0, %v1550
    %v1552 = vpop.f32.mrb[0].mxu0
    %1553 = vmatprep.mubr.f32.mxu0 0.0
    %v1554 = vand.u32 %v1332, 4294901760
    %v1555 = vsub.f32 %v1332, %v1554
    %v1556 = vand.u32 %v1555, 4294901760
    %v1557 = vsub.f32 %v1555, %v1556
    %v1558 = vand.u32 %v1557, 4294901760
    %1559 = vmatmul.mubr.f32.gmra.mrb[0].mxu0 %v1558
    %v1560 = vpop.f32.mrb[0].mxu0
    %v1561 = vadd.f32 0.0, %v1560
    %v1562 = vpop.f32.mrb[0].mxu0
    %1563 = vmatprep.mubr.f32.mxu0 0.0
    %v1564 = vand.u32 %v1338, 4294901760
    %v1565 = vsub.f32 %v1338, %v1564
    %v1566 = vand.u32 %v1565, 4294901760
    %v1567 = vsub.f32 %v1565, %v1566
    %v1568 = vand.u32 %v1567, 4294901760
    %1569 = vmatmul.mubr.f32.gmra.mrb[0].mxu0 %v1568
    %v1570 = vpop.f32.mrb[0].mxu0
    %v1571 = vadd.f32 0.0, %v1570
    %v1572 = vpop.f32.mrb[0].mxu0
    %1573 = vmatprep.mubr.f32.mxu0 0.0
    %v1574 = vand.u32 %v1344, 4294901760
    %v1575 = vsub.f32 %v1344, %v1574
    %v1576 = vand.u32 %v1575, 4294901760
    %v1577 = vsub.f32 %v1575, %v1576
    %v1578 = vand.u32 %v1577, 4294901760
    %1579 = vmatmul.mubr.f32.gmra.mrb[0].mxu0 %v1578
    %v1580 = vpop.f32.mrb[0].mxu0
    %v1581 = vadd.f32 0.0, %v1580
    %v1582 = vpop.f32.mrb[0].mxu0
    %1583 = vmatprep.mubr.f32.mxu0 0.0
    %v1584 = vand.u32 %v1350, 4294901760
    %v1585 = vsub.f32 %v1350, %v1584
    %v1586 = vand.u32 %v1585, 4294901760
    %v1587 = vsub.f32 %v1585, %v1586
    %v1588 = vand.u32 %v1587, 4294901760
    %1589 = vmatmul.mubr.f32.gmra.mrb[0].mxu0 %v1588
    %v1590 = vpop.f32.mrb[0].mxu0
    %v1591 = vadd.f32 0.0, %v1590
    %v1592 = vpop.f32.mrb[0].mxu0
    %1593 = vmatprep.mubr.f32.mxu0 0.0
    %v1594 = vand.u32 %v1356, 4294901760
    %v1595 = vsub.f32 %v1356, %v1594
    %v1596 = vand.u32 %v1595, 4294901760
    %v1597 = vsub.f32 %v1595, %v1596
    %v1598 = vand.u32 %v1597, 4294901760
    %1599 = vmatmul.mubr.f32.gmra.mrb[0].mxu0 %v1598
    %v1600 = vpop.f32.mrb[0].mxu0
    %v1601 = vadd.f32 0.0, %v1600
    %v1602 = vpop.f32.mrb[0].mxu0
    %1603 = vmatprep.mubr.f32.mxu0 0.0
    %v1604 = vand.u32 %v1362, 4294901760
    %v1605 = vsub.f32 %v1362, %v1604
    %v1606 = vand.u32 %v1605, 4294901760
    %v1607 = vsub.f32 %v1605, %v1606
    %v1608 = vand.u32 %v1607, 4294901760
    %1609 = vmatmul.mubr.f32.gmra.mrb[0].mxu0 %v1608
    %v1610 = vpop.f32.mrb[0].mxu0
    %v1611 = vadd.f32 0.0, %v1610
    %v1612 = vpop.f32.mrb[0].mxu0
    %1613 = vmatprep.mubr.f32.mxu0 0.0
    %v1614 = vand.u32 %v1368, 4294901760
    %v1615 = vsub.f32 %v1368, %v1614
    %v1616 = vand.u32 %v1615, 4294901760
    %v1617 = vsub.f32 %v1615, %v1616
    %v1618 = vand.u32 %v1617, 4294901760
    %1619 = vmatmul.mubr.f32.gmra.mrb[0].mxu0 %v1618
    %v1620 = vpop.f32.mrb[0].mxu0
    %v1621 = vadd.f32 0.0, %v1620
    %v1622 = vpop.f32.mrb[0].mxu0
    %1623 = vmatprep.mubr.f32.mxu0 0.0
    %v1624 = vand.u32 %v1374, 4294901760
    %v1625 = vsub.f32 %v1374, %v1624
    %v1626 = vand.u32 %v1625, 4294901760
    %v1627 = vsub.f32 %v1625, %v1626
    %v1628 = vand.u32 %v1627, 4294901760
    %1629 = vmatmul.mubr.f32.gmra.mrb[0].mxu0 %v1628
    %v1630 = vpop.f32.mrb[0].mxu0
    %v1631 = vadd.f32 0.0, %v1630
    %v1632 = vpop.f32.mrb[0].mxu0
    %1633 = vdwg.mxu0
    %1634 = vmatprep.subr.mxu0 0.0
    %v1635 = vand.u32 %v1377, 4294901760
    %v1636 = vsub.f32 %v1377, %v1635
    %v1637 = vand.u32 %v1636, 4294901760
    %v1638 = vsub.f32 %v1636, %v1637
    %v1639 = vand.u32 %v1638, 4294901760
    %1640 = vmatpush1.msra.mxu0 %v1639
    %1641 = vmatprep.subr.mxu0 0.0
    %v1642 = vand.u32 %v1378, 4294901760
    %v1643 = vsub.f32 %v1378, %v1642
    %v1644 = vand.u32 %v1643, 4294901760
    %v1645 = vsub.f32 %v1643, %v1644
    %v1646 = vand.u32 %v1645, 4294901760
    %1647 = vmatpush1.msra.mxu0 %v1646
    %1648 = vmatprep.subr.mxu0 0.0
    %v1649 = vand.u32 %v1379, 4294901760
    %v1650 = vsub.f32 %v1379, %v1649
    %v1651 = vand.u32 %v1650, 4294901760
    %v1652 = vsub.f32 %v1650, %v1651
    %v1653 = vand.u32 %v1652, 4294901760
    %1654 = vmatpush1.msra.mxu0 %v1653
    %1655 = vmatprep.subr.mxu0 0.0
    %v1656 = vand.u32 %v1380, 4294901760
    %v1657 = vsub.f32 %v1380, %v1656
    %v1658 = vand.u32 %v1657, 4294901760
    %v1659 = vsub.f32 %v1657, %v1658
    %v1660 = vand.u32 %v1659, 4294901760
    %1661 = vmatpush1.msra.mxu0 %v1660
    %1662 = vmatprep.subr.mxu0 0.0
    %v1663 = vand.u32 %v1381, 4294901760
    %v1664 = vsub.f32 %v1381, %v1663
    %v1665 = vand.u32 %v1664, 4294901760
    %v1666 = vsub.f32 %v1664, %v1665
    %v1667 = vand.u32 %v1666, 4294901760
    %1668 = vmatpush1.msra.mxu0 %v1667
    %1669 = vmatprep.subr.mxu0 0.0
    %v1670 = vand.u32 %v1382, 4294901760
    %v1671 = vsub.f32 %v1382, %v1670
    %v1672 = vand.u32 %v1671, 4294901760
    %v1673 = vsub.f32 %v1671, %v1672
    %v1674 = vand.u32 %v1673, 4294901760
    %1675 = vmatpush1.msra.mxu0 %v1674
    %1676 = vmatprep.subr.mxu0 0.0
    %v1677 = vand.u32 %v1383, 4294901760
    %v1678 = vsub.f32 %v1383, %v1677
    %v1679 = vand.u32 %v1678, 4294901760
    %v1680 = vsub.f32 %v1678, %v1679
    %v1681 = vand.u32 %v1680, 4294901760
    %1682 = vmatpush1.msra.mxu0 %v1681
    %1683 = vmatprep.subr.mxu0 0.0
    %v1684 = vand.u32 %v1384, 4294901760
    %v1685 = vsub.f32 %v1384, %v1684
    %v1686 = vand.u32 %v1685, 4294901760
    %v1687 = vsub.f32 %v1685, %v1686
    %v1688 = vand.u32 %v1687, 4294901760
    %1689 = vmatpush1.msra.mxu0 %v1688
    %1690 = vmatprep.subr.mxu0 0.0
    %v1691 = vand.u32 %v1385, 4294901760
    %v1692 = vsub.f32 %v1385, %v1691
    %v1693 = vand.u32 %v1692, 4294901760
    %v1694 = vsub.f32 %v1692, %v1693
    %v1695 = vand.u32 %v1694, 4294901760
    %1696 = vmatpush1.msra.mxu0 %v1695
    %1697 = vmatprep.subr.mxu0 0.0
    %v1698 = vand.u32 %v1386, 4294901760
    %v1699 = vsub.f32 %v1386, %v1698
    %v1700 = vand.u32 %v1699, 4294901760
    %v1701 = vsub.f32 %v1699, %v1700
    %v1702 = vand.u32 %v1701, 4294901760
    %1703 = vmatpush1.msra.mxu0 %v1702
    %1704 = vmatprep.subr.mxu0 0.0
    %v1705 = vand.u32 %v1387, 4294901760
    %v1706 = vsub.f32 %v1387, %v1705
    %v1707 = vand.u32 %v1706, 4294901760
    %v1708 = vsub.f32 %v1706, %v1707
    %v1709 = vand.u32 %v1708, 4294901760
    %1710 = vmatpush1.msra.mxu0 %v1709
    %1711 = vmatprep.subr.mxu0 0.0
    %v1712 = vand.u32 %v1388, 4294901760
    %v1713 = vsub.f32 %v1388, %v1712
    %v1714 = vand.u32 %v1713, 4294901760
    %v1715 = vsub.f32 %v1713, %v1714
    %v1716 = vand.u32 %v1715, 4294901760
    %1717 = vmatpush1.msra.mxu0 %v1716
    %1718 = vmatprep.subr.mxu0 0.0
    %v1719 = vand.u32 %v1389, 4294901760
    %v1720 = vsub.f32 %v1389, %v1719
    %v1721 = vand.u32 %v1720, 4294901760
    %v1722 = vsub.f32 %v1720, %v1721
    %v1723 = vand.u32 %v1722, 4294901760
    %1724 = vmatpush1.msra.mxu0 %v1723
    %1725 = vmatprep.subr.mxu0 0.0
    %v1726 = vand.u32 %v1390, 4294901760
    %v1727 = vsub.f32 %v1390, %v1726
    %v1728 = vand.u32 %v1727, 4294901760
    %v1729 = vsub.f32 %v1727, %v1728
    %v1730 = vand.u32 %v1729, 4294901760
    %1731 = vmatpush1.msra.mxu0 %v1730
    %1732 = vmatprep.subr.mxu0 0.0
    %v1733 = vand.u32 %v1391, 4294901760
    %v1734 = vsub.f32 %v1391, %v1733
    %v1735 = vand.u32 %v1734, 4294901760
    %v1736 = vsub.f32 %v1734, %v1735
    %v1737 = vand.u32 %v1736, 4294901760
    %1738 = vmatpush1.msra.mxu0 %v1737
    %1739 = vmatprep.subr.mxu0 0.0
    %v1740 = vand.u32 %v1392, 4294901760
    %v1741 = vsub.f32 %v1392, %v1740
    %v1742 = vand.u32 %v1741, 4294901760
    %v1743 = vsub.f32 %v1741, %v1742
    %v1744 = vand.u32 %v1743, 4294901760
    %1745 = vmatpush1.msra.mxu0 %v1744
    %1746 = vmatprep.subr.mxu0 0.0
    %1747 = vmatpush1.msra.mxu0 0.0
    %1748 = vmatprep.subr.mxu0 0.0
    %1749 = vmatpush1.msra.mxu0 0.0
    %1750 = vmatprep.subr.mxu0 0.0
    %1751 = vmatpush1.msra.mxu0 0.0
    %1752 = vmatprep.subr.mxu0 0.0
    %1753 = vmatpush1.msra.mxu0 0.0
    %1754 = vmatprep.subr.mxu0 0.0
    %1755 = vmatpush1.msra.mxu0 0.0
    %1756 = vmatprep.subr.mxu0 0.0
    %1757 = vmatpush1.msra.mxu0 0.0
    %1758 = vmatprep.subr.mxu0 0.0
    %1759 = vmatpush1.msra.mxu0 0.0
    %1760 = vmatprep.subr.mxu0 0.0
    %1761 = vmatpush1.msra.mxu0 0.0
    %1762 = vmatprep.subr.mxu0 0.0
    %1763 = vmatpush1.msra.mxu0 0.0
    %1764 = vmatprep.subr.mxu0 0.0
    %1765 = vmatpush1.msra.mxu0 0.0
    %1766 = vmatprep.subr.mxu0 0.0
    %1767 = vmatpush1.msra.mxu0 0.0
    %1768 = vmatprep.subr.mxu0 0.0
    %1769 = vmatpush1.msra.mxu0 0.0
    %1770 = vmatprep.subr.mxu0 0.0
    %1771 = vmatpush1.msra.mxu0 0.0
    %1772 = vmatprep.subr.mxu0 0.0
    %1773 = vmatpush1.msra.mxu0 0.0
    %1774 = vmatprep.subr.mxu0 0.0
    %1775 = vmatpush1.msra.mxu0 0.0
    %1776 = vmatprep.subr.mxu0 0.0
    %1777 = vmatpush1.msra.mxu0 0.0
    %1778 = vmatprep.mubr.f32.mxu0 0.0
    %v1779 = vand.u32 %v1284, 4294901760
    %1780 = vmatmul.mubr.f32.gmra.mrb[0].mxu0 %v1779
    %v1781 = vpop.f32.mrb[0].mxu0
    %v1782 = vadd.f32 %v1481, %v1781
    %v1783 = vpop.f32.mrb[0].mxu0
    %1784 = vmatprep.mubr.f32.mxu0 0.0
    %v1785 = vand.u32 %v1290, 4294901760
    %1786 = vmatmul.mubr.f32.gmra.mrb[0].mxu0 %v1785
    %v1787 = vpop.f32.mrb[0].mxu0
    %v1788 = vadd.f32 %v1491, %v1787
    %v1789 = vpop.f32.mrb[0].mxu0
    %1790 = vmatprep.mubr.f32.mxu0 0.0
    %v1791 = vand.u32 %v1296, 4294901760
    %1792 = vmatmul.mubr.f32.gmra.mrb[0].mxu0 %v1791
    %v1793 = vpop.f32.mrb[0].mxu0
    %v1794 = vadd.f32 %v1501, %v1793
    %v1795 = vpop.f32.mrb[0].mxu0
    %1796 = vmatprep.mubr.f32.mxu0 0.0
    %v1797 = vand.u32 %v1302, 4294901760
    %1798 = vmatmul.mubr.f32.gmra.mrb[0].mxu0 %v1797
    %v1799 = vpop.f32.mrb[0].mxu0
    %v1800 = vadd.f32 %v1511, %v1799
    %v1801 = vpop.f32.mrb[0].mxu0
    %1802 = vmatprep.mubr.f32.mxu0 0.0
    %v1803 = vand.u32 %v1308, 4294901760
    %1804 = vmatmul.mubr.f32.gmra.mrb[0].mxu0 %v1803
    %v1805 = vpop.f32.mrb[0].mxu0
    %v1806 = vadd.f32 %v1521, %v1805
    %v1807 = vpop.f32.mrb[0].mxu0
    %1808 = vmatprep.mubr.f32.mxu0 0.0
    %v1809 = vand.u32 %v1314, 4294901760
    %1810 = vmatmul.mubr.f32.gmra.mrb[0].mxu0 %v1809
    %v1811 = vpop.f32.mrb[0].mxu0
    %v1812 = vadd.f32 %v1531, %v1811
    %v1813 = vpop.f32.mrb[0].mxu0
    %1814 = vmatprep.mubr.f32.mxu0 0.0
    %v1815 = vand.u32 %v1320, 4294901760
    %1816 = vmatmul.mubr.f32.gmra.mrb[0].mxu0 %v1815
    %v1817 = vpop.f32.mrb[0].mxu0
    %v1818 = vadd.f32 %v1541, %v1817
    %v1819 = vpop.f32.mrb[0].mxu0
    %1820 = vmatprep.mubr.f32.mxu0 0.0
    %v1821 = vand.u32 %v1326, 4294901760
    %1822 = vmatmul.mubr.f32.gmra.mrb[0].mxu0 %v1821
    %v1823 = vpop.f32.mrb[0].mxu0
    %v1824 = vadd.f32 %v1551, %v1823
    %v1825 = vpop.f32.mrb[0].mxu0
    %1826 = vmatprep.mubr.f32.mxu0 0.0
    %v1827 = vand.u32 %v1332, 4294901760
    %1828 = vmatmul.mubr.f32.gmra.mrb[0].mxu0 %v1827
    %v1829 = vpop.f32.mrb[0].mxu0
    %v1830 = vadd.f32 %v1561, %v1829
    %v1831 = vpop.f32.mrb[0].mxu0
    %1832 = vmatprep.mubr.f32.mxu0 0.0
    %v1833 = vand.u32 %v1338, 4294901760
    %1834 = vmatmul.mubr.f32.gmra.mrb[0].mxu0 %v1833
    %v1835 = vpop.f32.mrb[0].mxu0
    %v1836 = vadd.f32 %v1571, %v1835
    %v1837 = vpop.f32.mrb[0].mxu0
    %1838 = vmatprep.mubr.f32.mxu0 0.0
    %v1839 = vand.u32 %v1344, 4294901760
    %1840 = vmatmul.mubr.f32.gmra.mrb[0].mxu0 %v1839
    %v1841 = vpop.f32.mrb[0].mxu0
    %v1842 = vadd.f32 %v1581, %v1841
    %v1843 = vpop.f32.mrb[0].mxu0
    %1844 = vmatprep.mubr.f32.mxu0 0.0
    %v1845 = vand.u32 %v1350, 4294901760
    %1846 = vmatmul.mubr.f32.gmra.mrb[0].mxu0 %v1845
    %v1847 = vpop.f32.mrb[0].mxu0
    %v1848 = vadd.f32 %v1591, %v1847
    %v1849 = vpop.f32.mrb[0].mxu0
    %1850 = vmatprep.mubr.f32.mxu0 0.0
    %v1851 = vand.u32 %v1356, 4294901760
    %1852 = vmatmul.mubr.f32.gmra.mrb[0].mxu0 %v1851
    %v1853 = vpop.f32.mrb[0].mxu0
    %v1854 = vadd.f32 %v1601, %v1853
    %v1855 = vpop.f32.mrb[0].mxu0
    %1856 = vmatprep.mubr.f32.mxu0 0.0
    %v1857 = vand.u32 %v1362, 4294901760
    %1858 = vmatmul.mubr.f32.gmra.mrb[0].mxu0 %v1857
    %v1859 = vpop.f32.mrb[0].mxu0
    %v1860 = vadd.f32 %v1611, %v1859
    %v1861 = vpop.f32.mrb[0].mxu0
    %1862 = vmatprep.mubr.f32.mxu0 0.0
    %v1863 = vand.u32 %v1368, 4294901760
    %1864 = vmatmul.mubr.f32.gmra.mrb[0].mxu0 %v1863
    %v1865 = vpop.f32.mrb[0].mxu0
    %v1866 = vadd.f32 %v1621, %v1865
    %v1867 = vpop.f32.mrb[0].mxu0
    %1868 = vmatprep.mubr.f32.mxu0 0.0
    %v1869 = vand.u32 %v1374, 4294901760
    %1870 = vmatmul.mubr.f32.gmra.mrb[0].mxu0 %v1869
    %v1871 = vpop.f32.mrb[0].mxu0
    %v1872 = vadd.f32 %v1631, %v1871
    %v1873 = vpop.f32.mrb[0].mxu0
    %1874 = vdwg.mxu0
    %1875 = vmatprep.subr.mxu0 0.0
    %v1876 = vand.u32 %v1377, 4294901760
    %v1877 = vsub.f32 %v1377, %v1876
    %1878 = vmatpush1.msra.mxu0 %v1877
    %1879 = vmatprep.subr.mxu0 0.0
    %v1880 = vand.u32 %v1378, 4294901760
    %v1881 = vsub.f32 %v1378, %v1880
    %1882 = vmatpush1.msra.mxu0 %v1881
    %1883 = vmatprep.subr.mxu0 0.0
    %v1884 = vand.u32 %v1379, 4294901760
    %v1885 = vsub.f32 %v1379, %v1884
    %1886 = vmatpush1.msra.mxu0 %v1885
    %1887 = vmatprep.subr.mxu0 0.0
    %v1888 = vand.u32 %v1380, 4294901760
    %v1889 = vsub.f32 %v1380, %v1888
    %1890 = vmatpush1.msra.mxu0 %v1889
    %1891 = vmatprep.subr.mxu0 0.0
    %v1892 = vand.u32 %v1381, 4294901760
    %v1893 = vsub.f32 %v1381, %v1892
    %1894 = vmatpush1.msra.mxu0 %v1893
    %1895 = vmatprep.subr.mxu0 0.0
    %v1896 = vand.u32 %v1382, 4294901760
    %v1897 = vsub.f32 %v1382, %v1896
    %1898 = vmatpush1.msra.mxu0 %v1897
    %1899 = vmatprep.subr.mxu0 0.0
    %v1900 = vand.u32 %v1383, 4294901760
    %v1901 = vsub.f32 %v1383, %v1900
    %1902 = vmatpush1.msra.mxu0 %v1901
    %1903 = vmatprep.subr.mxu0 0.0
    %v1904 = vand.u32 %v1384, 4294901760
    %v1905 = vsub.f32 %v1384, %v1904
    %1906 = vmatpush1.msra.mxu0 %v1905
    %1907 = vmatprep.subr.mxu0 0.0
    %v1908 = vand.u32 %v1385, 4294901760
    %v1909 = vsub.f32 %v1385, %v1908
    %1910 = vmatpush1.msra.mxu0 %v1909
    %1911 = vmatprep.subr.mxu0 0.0
    %v1912 = vand.u32 %v1386, 4294901760
    %v1913 = vsub.f32 %v1386, %v1912
    %1914 = vmatpush1.msra.mxu0 %v1913
    %1915 = vmatprep.subr.mxu0 0.0
    %v1916 = vand.u32 %v1387, 4294901760
    %v1917 = vsub.f32 %v1387, %v1916
    %1918 = vmatpush1.msra.mxu0 %v1917
    %1919 = vmatprep.subr.mxu0 0.0
    %v1920 = vand.u32 %v1388, 4294901760
    %v1921 = vsub.f32 %v1388, %v1920
    %1922 = vmatpush1.msra.mxu0 %v1921
    %1923 = vmatprep.subr.mxu0 0.0
    %v1924 = vand.u32 %v1389, 4294901760
    %v1925 = vsub.f32 %v1389, %v1924
    %1926 = vmatpush1.msra.mxu0 %v1925
    %1927 = vmatprep.subr.mxu0 0.0
    %v1928 = vand.u32 %v1390, 4294901760
    %v1929 = vsub.f32 %v1390, %v1928
    %1930 = vmatpush1.msra.mxu0 %v1929
    %1931 = vmatprep.subr.mxu0 0.0
    %v1932 = vand.u32 %v1391, 4294901760
    %v1933 = vsub.f32 %v1391, %v1932
    %1934 = vmatpush1.msra.mxu0 %v1933
    %1935 = vmatprep.subr.mxu0 0.0
    %v1936 = vand.u32 %v1392, 4294901760
    %v1937 = vsub.f32 %v1392, %v1936
    %1938 = vmatpush1.msra.mxu0 %v1937
    %1939 = vmatprep.subr.mxu0 0.0
    %1940 = vmatpush1.msra.mxu0 0.0
    %1941 = vmatprep.subr.mxu0 0.0
    %1942 = vmatpush1.msra.mxu0 0.0
    %1943 = vmatprep.subr.mxu0 0.0
    %1944 = vmatpush1.msra.mxu0 0.0
    %1945 = vmatprep.subr.mxu0 0.0
    %1946 = vmatpush1.msra.mxu0 0.0
    %1947 = vmatprep.subr.mxu0 0.0
    %1948 = vmatpush1.msra.mxu0 0.0
    %1949 = vmatprep.subr.mxu0 0.0
    %1950 = vmatpush1.msra.mxu0 0.0
    %1951 = vmatprep.subr.mxu0 0.0
    %1952 = vmatpush1.msra.mxu0 0.0
    %1953 = vmatprep.subr.mxu0 0.0
    %1954 = vmatpush1.msra.mxu0 0.0
    %1955 = vmatprep.subr.mxu0 0.0
    %1956 = vmatpush1.msra.mxu0 0.0
    %1957 = vmatprep.subr.mxu0 0.0
    %1958 = vmatpush1.msra.mxu0 0.0
    %1959 = vmatprep.subr.mxu0 0.0
    %1960 = vmatpush1.msra.mxu0 0.0
    %1961 = vmatprep.subr.mxu0 0.0
    %1962 = vmatpush1.msra.mxu0 0.0
    %1963 = vmatprep.subr.mxu0 0.0
    %1964 = vmatpush1.msra.mxu0 0.0
    %1965 = vmatprep.subr.mxu0 0.0
    %1966 = vmatpush1.msra.mxu0 0.0
    %1967 = vmatprep.subr.mxu0 0.0
    %1968 = vmatpush1.msra.mxu0 0.0
    %1969 = vmatprep.subr.mxu0 0.0
    %1970 = vmatpush1.msra.mxu0 0.0
    %1971 = vmatprep.mubr.f32.mxu0 0.0
    %v1972 = vand.u32 %v1284, 4294901760
    %v1973 = vsub.f32 %v1284, %v1972
    %1974 = vmatmul.mubr.f32.gmra.mrb[0].mxu0 %v1973
    %v1975 = vpop.f32.mrb[0].mxu0
    %v1976 = vadd.f32 %v1782, %v1975
    %v1977 = vpop.f32.mrb[0].mxu0
    %1978 = vmatprep.mubr.f32.mxu0 0.0
    %v1979 = vand.u32 %v1290, 4294901760
    %v1980 = vsub.f32 %v1290, %v1979
    %1981 = vmatmul.mubr.f32.gmra.mrb[0].mxu0 %v1980
    %v1982 = vpop.f32.mrb[0].mxu0
    %v1983 = vadd.f32 %v1788, %v1982
    %v1984 = vpop.f32.mrb[0].mxu0
    %1985 = vmatprep.mubr.f32.mxu0 0.0
    %v1986 = vand.u32 %v1296, 4294901760
    %v1987 = vsub.f32 %v1296, %v1986
    %1988 = vmatmul.mubr.f32.gmra.mrb[0].mxu0 %v1987
    %v1989 = vpop.f32.mrb[0].mxu0
    %v1990 = vadd.f32 %v1794, %v1989
    %v1991 = vpop.f32.mrb[0].mxu0
    %1992 = vmatprep.mubr.f32.mxu0 0.0
    %v1993 = vand.u32 %v1302, 4294901760
    %v1994 = vsub.f32 %v1302, %v1993
    %1995 = vmatmul.mubr.f32.gmra.mrb[0].mxu0 %v1994
    %v1996 = vpop.f32.mrb[0].mxu0
    %v1997 = vadd.f32 %v1800, %v1996
    %v1998 = vpop.f32.mrb[0].mxu0
    %1999 = vmatprep.mubr.f32.mxu0 0.0
    %v2000 = vand.u32 %v1308, 4294901760
    %v2001 = vsub.f32 %v1308, %v2000
    %2002 = vmatmul.mubr.f32.gmra.mrb[0].mxu0 %v2001
    %v2003 = vpop.f32.mrb[0].mxu0
    %v2004 = vadd.f32 %v1806, %v2003
    %v2005 = vpop.f32.mrb[0].mxu0
    %2006 = vmatprep.mubr.f32.mxu0 0.0
    %v2007 = vand.u32 %v1314, 4294901760
    %v2008 = vsub.f32 %v1314, %v2007
    %2009 = vmatmul.mubr.f32.gmra.mrb[0].mxu0 %v2008
    %v2010 = vpop.f32.mrb[0].mxu0
    %v2011 = vadd.f32 %v1812, %v2010
    %v2012 = vpop.f32.mrb[0].mxu0
    %2013 = vmatprep.mubr.f32.mxu0 0.0
    %v2014 = vand.u32 %v1320, 4294901760
    %v2015 = vsub.f32 %v1320, %v2014
    %2016 = vmatmul.mubr.f32.gmra.mrb[0].mxu0 %v2015
    %v2017 = vpop.f32.mrb[0].mxu0
    %v2018 = vadd.f32 %v1818, %v2017
    %v2019 = vpop.f32.mrb[0].mxu0
    %2020 = vmatprep.mubr.f32.mxu0 0.0
    %v2021 = vand.u32 %v1326, 4294901760
    %v2022 = vsub.f32 %v1326, %v2021
    %2023 = vmatmul.mubr.f32.gmra.mrb[0].mxu0 %v2022
    %v2024 = vpop.f32.mrb[0].mxu0
    %v2025 = vadd.f32 %v1824, %v2024
    %v2026 = vpop.f32.mrb[0].mxu0
    %2027 = vmatprep.mubr.f32.mxu0 0.0
    %v2028 = vand.u32 %v1332, 4294901760
    %v2029 = vsub.f32 %v1332, %v2028
    %2030 = vmatmul.mubr.f32.gmra.mrb[0].mxu0 %v2029
    %v2031 = vpop.f32.mrb[0].mxu0
    %v2032 = vadd.f32 %v1830, %v2031
    %v2033 = vpop.f32.mrb[0].mxu0
    %2034 = vmatprep.mubr.f32.mxu0 0.0
    %v2035 = vand.u32 %v1338, 4294901760
    %v2036 = vsub.f32 %v1338, %v2035
    %2037 = vmatmul.mubr.f32.gmra.mrb[0].mxu0 %v2036
    %v2038 = vpop.f32.mrb[0].mxu0
    %v2039 = vadd.f32 %v1836, %v2038
    %v2040 = vpop.f32.mrb[0].mxu0
    %2041 = vmatprep.mubr.f32.mxu0 0.0
    %v2042 = vand.u32 %v1344, 4294901760
    %v2043 = vsub.f32 %v1344, %v2042
    %2044 = vmatmul.mubr.f32.gmra.mrb[0].mxu0 %v2043
    %v2045 = vpop.f32.mrb[0].mxu0
    %v2046 = vadd.f32 %v1842, %v2045
    %v2047 = vpop.f32.mrb[0].mxu0
    %2048 = vmatprep.mubr.f32.mxu0 0.0
    %v2049 = vand.u32 %v1350, 4294901760
    %v2050 = vsub.f32 %v1350, %v2049
    %2051 = vmatmul.mubr.f32.gmra.mrb[0].mxu0 %v2050
    %v2052 = vpop.f32.mrb[0].mxu0
    %v2053 = vadd.f32 %v1848, %v2052
    %v2054 = vpop.f32.mrb[0].mxu0
    %2055 = vmatprep.mubr.f32.mxu0 0.0
    %v2056 = vand.u32 %v1356, 4294901760
    %v2057 = vsub.f32 %v1356, %v2056
    %2058 = vmatmul.mubr.f32.gmra.mrb[0].mxu0 %v2057
    %v2059 = vpop.f32.mrb[0].mxu0
    %v2060 = vadd.f32 %v1854, %v2059
    %v2061 = vpop.f32.mrb[0].mxu0
    %2062 = vmatprep.mubr.f32.mxu0 0.0
    %v2063 = vand.u32 %v1362, 4294901760
    %v2064 = vsub.f32 %v1362, %v2063
    %2065 = vmatmul.mubr.f32.gmra.mrb[0].mxu0 %v2064
    %v2066 = vpop.f32.mrb[0].mxu0
    %v2067 = vadd.f32 %v1860, %v2066
    %v2068 = vpop.f32.mrb[0].mxu0
    %2069 = vmatprep.mubr.f32.mxu0 0.0
    %v2070 = vand.u32 %v1368, 4294901760
    %v2071 = vsub.f32 %v1368, %v2070
    %2072 = vmatmul.mubr.f32.gmra.mrb[0].mxu0 %v2071
    %v2073 = vpop.f32.mrb[0].mxu0
    %v2074 = vadd.f32 %v1866, %v2073
    %v2075 = vpop.f32.mrb[0].mxu0
    %2076 = vmatprep.mubr.f32.mxu0 0.0
    %v2077 = vand.u32 %v1374, 4294901760
    %v2078 = vsub.f32 %v1374, %v2077
    %2079 = vmatmul.mubr.f32.gmra.mrb[0].mxu0 %v2078
    %v2080 = vpop.f32.mrb[0].mxu0
    %v2081 = vadd.f32 %v1872, %v2080
    %v2082 = vpop.f32.mrb[0].mxu0
    %2083 = vdwg.mxu0
    %2084 = vmatprep.subr.mxu0 0.0
    %v2085 = vand.u32 %v1377, 4294901760
    %2086 = vmatpush1.msra.mxu0 %v2085
    %2087 = vmatprep.subr.mxu0 0.0
    %v2088 = vand.u32 %v1378, 4294901760
    %2089 = vmatpush1.msra.mxu0 %v2088
    %2090 = vmatprep.subr.mxu0 0.0
    %v2091 = vand.u32 %v1379, 4294901760
    %2092 = vmatpush1.msra.mxu0 %v2091
    %2093 = vmatprep.subr.mxu0 0.0
    %v2094 = vand.u32 %v1380, 4294901760
    %2095 = vmatpush1.msra.mxu0 %v2094
    %2096 = vmatprep.subr.mxu0 0.0
    %v2097 = vand.u32 %v1381, 4294901760
    %2098 = vmatpush1.msra.mxu0 %v2097
    %2099 = vmatprep.subr.mxu0 0.0
    %v2100 = vand.u32 %v1382, 4294901760
    %2101 = vmatpush1.msra.mxu0 %v2100
    %2102 = vmatprep.subr.mxu0 0.0
    %v2103 = vand.u32 %v1383, 4294901760
    %2104 = vmatpush1.msra.mxu0 %v2103
    %2105 = vmatprep.subr.mxu0 0.0
    %v2106 = vand.u32 %v1384, 4294901760
    %2107 = vmatpush1.msra.mxu0 %v2106
    %2108 = vmatprep.subr.mxu0 0.0
    %v2109 = vand.u32 %v1385, 4294901760
    %2110 = vmatpush1.msra.mxu0 %v2109
    %2111 = vmatprep.subr.mxu0 0.0
    %v2112 = vand.u32 %v1386, 4294901760
    %2113 = vmatpush1.msra.mxu0 %v2112
    %2114 = vmatprep.subr.mxu0 0.0
    %v2115 = vand.u32 %v1387, 4294901760
    %2116 = vmatpush1.msra.mxu0 %v2115
    %2117 = vmatprep.subr.mxu0 0.0
    %v2118 = vand.u32 %v1388, 4294901760
    %2119 = vmatpush1.msra.mxu0 %v2118
    %2120 = vmatprep.subr.mxu0 0.0
    %v2121 = vand.u32 %v1389, 4294901760
    %2122 = vmatpush1.msra.mxu0 %v2121
    %2123 = vmatprep.subr.mxu0 0.0
    %v2124 = vand.u32 %v1390, 4294901760
    %2125 = vmatpush1.msra.mxu0 %v2124
    %2126 = vmatprep.subr.mxu0 0.0
    %v2127 = vand.u32 %v1391, 4294901760
    %2128 = vmatpush1.msra.mxu0 %v2127
    %2129 = vmatprep.subr.mxu0 0.0
    %v2130 = vand.u32 %v1392, 4294901760
    %2131 = vmatpush1.msra.mxu0 %v2130
    %2132 = vmatprep.subr.mxu0 0.0
    %2133 = vmatpush1.msra.mxu0 0.0
    %2134 = vmatprep.subr.mxu0 0.0
    %2135 = vmatpush1.msra.mxu0 0.0
    %2136 = vmatprep.subr.mxu0 0.0
    %2137 = vmatpush1.msra.mxu0 0.0
    %2138 = vmatprep.subr.mxu0 0.0
    %2139 = vmatpush1.msra.mxu0 0.0
    %2140 = vmatprep.subr.mxu0 0.0
    %2141 = vmatpush1.msra.mxu0 0.0
    %2142 = vmatprep.subr.mxu0 0.0
    %2143 = vmatpush1.msra.mxu0 0.0
    %2144 = vmatprep.subr.mxu0 0.0
    %2145 = vmatpush1.msra.mxu0 0.0
    %2146 = vmatprep.subr.mxu0 0.0
    %2147 = vmatpush1.msra.mxu0 0.0
    %2148 = vmatprep.subr.mxu0 0.0
    %2149 = vmatpush1.msra.mxu0 0.0
    %2150 = vmatprep.subr.mxu0 0.0
    %2151 = vmatpush1.msra.mxu0 0.0
    %2152 = vmatprep.subr.mxu0 0.0
    %2153 = vmatpush1.msra.mxu0 0.0
    %2154 = vmatprep.subr.mxu0 0.0
    %2155 = vmatpush1.msra.mxu0 0.0
    %2156 = vmatprep.subr.mxu0 0.0
    %2157 = vmatpush1.msra.mxu0 0.0
    %2158 = vmatprep.subr.mxu0 0.0
    %2159 = vmatpush1.msra.mxu0 0.0
    %2160 = vmatprep.subr.mxu0 0.0
    %2161 = vmatpush1.msra.mxu0 0.0
    %2162 = vmatprep.subr.mxu0 0.0
    %2163 = vmatpush1.msra.mxu0 0.0
    %2164 = vmatprep.mubr.f32.mxu0 0.0
    %v2165 = vand.u32 %v1284, 4294901760
    %v2166 = vsub.f32 %v1284, %v2165
    %v2167 = vand.u32 %v2166, 4294901760
    %2168 = vmatmul.mubr.f32.gmra.mrb[0].mxu0 %v2167
    %v2169 = vpop.f32.mrb[0].mxu0
    %v2170 = vadd.f32 %v1976, %v2169
    %v2171 = vpop.f32.mrb[0].mxu0
    %2172 = vmatprep.mubr.f32.mxu0 0.0
    %v2173 = vand.u32 %v1290, 4294901760
    %v2174 = vsub.f32 %v1290, %v2173
    %v2175 = vand.u32 %v2174, 4294901760
    %2176 = vmatmul.mubr.f32.gmra.mrb[0].mxu0 %v2175
    %v2177 = vpop.f32.mrb[0].mxu0
    %v2178 = vadd.f32 %v1983, %v2177
    %v2179 = vpop.f32.mrb[0].mxu0
    %2180 = vmatprep.mubr.f32.mxu0 0.0
    %v2181 = vand.u32 %v1296, 4294901760
    %v2182 = vsub.f32 %v1296, %v2181
    %v2183 = vand.u32 %v2182, 4294901760
    %2184 = vmatmul.mubr.f32.gmra.mrb[0].mxu0 %v2183
    %v2185 = vpop.f32.mrb[0].mxu0
    %v2186 = vadd.f32 %v1990, %v2185
    %v2187 = vpop.f32.mrb[0].mxu0
    %2188 = vmatprep.mubr.f32.mxu0 0.0
    %v2189 = vand.u32 %v1302, 4294901760
    %v2190 = vsub.f32 %v1302, %v2189
    %v2191 = vand.u32 %v2190, 4294901760
    %2192 = vmatmul.mubr.f32.gmra.mrb[0].mxu0 %v2191
    %v2193 = vpop.f32.mrb[0].mxu0
    %v2194 = vadd.f32 %v1997, %v2193
    %v2195 = vpop.f32.mrb[0].mxu0
    %2196 = vmatprep.mubr.f32.mxu0 0.0
    %v2197 = vand.u32 %v1308, 4294901760
    %v2198 = vsub.f32 %v1308, %v2197
    %v2199 = vand.u32 %v2198, 4294901760
    %2200 = vmatmul.mubr.f32.gmra.mrb[0].mxu0 %v2199
    %v2201 = vpop.f32.mrb[0].mxu0
    %v2202 = vadd.f32 %v2004, %v2201
    %v2203 = vpop.f32.mrb[0].mxu0
    %2204 = vmatprep.mubr.f32.mxu0 0.0
    %v2205 = vand.u32 %v1314, 4294901760
    %v2206 = vsub.f32 %v1314, %v2205
    %v2207 = vand.u32 %v2206, 4294901760
    %2208 = vmatmul.mubr.f32.gmra.mrb[0].mxu0 %v2207
    %v2209 = vpop.f32.mrb[0].mxu0
    %v2210 = vadd.f32 %v2011, %v2209
    %v2211 = vpop.f32.mrb[0].mxu0
    %2212 = vmatprep.mubr.f32.mxu0 0.0
    %v2213 = vand.u32 %v1320, 4294901760
    %v2214 = vsub.f32 %v1320, %v2213
    %v2215 = vand.u32 %v2214, 4294901760
    %2216 = vmatmul.mubr.f32.gmra.mrb[0].mxu0 %v2215
    %v2217 = vpop.f32.mrb[0].mxu0
    %v2218 = vadd.f32 %v2018, %v2217
    %v2219 = vpop.f32.mrb[0].mxu0
    %2220 = vmatprep.mubr.f32.mxu0 0.0
    %v2221 = vand.u32 %v1326, 4294901760
    %v2222 = vsub.f32 %v1326, %v2221
    %v2223 = vand.u32 %v2222, 4294901760
    %2224 = vmatmul.mubr.f32.gmra.mrb[0].mxu0 %v2223
    %v2225 = vpop.f32.mrb[0].mxu0
    %v2226 = vadd.f32 %v2025, %v2225
    %v2227 = vpop.f32.mrb[0].mxu0
    %2228 = vmatprep.mubr.f32.mxu0 0.0
    %v2229 = vand.u32 %v1332, 4294901760
    %v2230 = vsub.f32 %v1332, %v2229
    %v2231 = vand.u32 %v2230, 4294901760
    %2232 = vmatmul.mubr.f32.gmra.mrb[0].mxu0 %v2231
    %v2233 = vpop.f32.mrb[0].mxu0
    %v2234 = vadd.f32 %v2032, %v2233
    %v2235 = vpop.f32.mrb[0].mxu0
    %2236 = vmatprep.mubr.f32.mxu0 0.0
    %v2237 = vand.u32 %v1338, 4294901760
    %v2238 = vsub.f32 %v1338, %v2237
    %v2239 = vand.u32 %v2238, 4294901760
    %2240 = vmatmul.mubr.f32.gmra.mrb[0].mxu0 %v2239
    %v2241 = vpop.f32.mrb[0].mxu0
    %v2242 = vadd.f32 %v2039, %v2241
    %v2243 = vpop.f32.mrb[0].mxu0
    %2244 = vmatprep.mubr.f32.mxu0 0.0
    %v2245 = vand.u32 %v1344, 4294901760
    %v2246 = vsub.f32 %v1344, %v2245
    %v2247 = vand.u32 %v2246, 4294901760
    %2248 = vmatmul.mubr.f32.gmra.mrb[0].mxu0 %v2247
    %v2249 = vpop.f32.mrb[0].mxu0
    %v2250 = vadd.f32 %v2046, %v2249
    %v2251 = vpop.f32.mrb[0].mxu0
    %2252 = vmatprep.mubr.f32.mxu0 0.0
    %v2253 = vand.u32 %v1350, 4294901760
    %v2254 = vsub.f32 %v1350, %v2253
    %v2255 = vand.u32 %v2254, 4294901760
    %2256 = vmatmul.mubr.f32.gmra.mrb[0].mxu0 %v2255
    %v2257 = vpop.f32.mrb[0].mxu0
    %v2258 = vadd.f32 %v2053, %v2257
    %v2259 = vpop.f32.mrb[0].mxu0
    %2260 = vmatprep.mubr.f32.mxu0 0.0
    %v2261 = vand.u32 %v1356, 4294901760
    %v2262 = vsub.f32 %v1356, %v2261
    %v2263 = vand.u32 %v2262, 4294901760
    %2264 = vmatmul.mubr.f32.gmra.mrb[0].mxu0 %v2263
    %v2265 = vpop.f32.mrb[0].mxu0
    %v2266 = vadd.f32 %v2060, %v2265
    %v2267 = vpop.f32.mrb[0].mxu0
    %2268 = vmatprep.mubr.f32.mxu0 0.0
    %v2269 = vand.u32 %v1362, 4294901760
    %v2270 = vsub.f32 %v1362, %v2269
    %v2271 = vand.u32 %v2270, 4294901760
    %2272 = vmatmul.mubr.f32.gmra.mrb[0].mxu0 %v2271
    %v2273 = vpop.f32.mrb[0].mxu0
    %v2274 = vadd.f32 %v2067, %v2273
    %v2275 = vpop.f32.mrb[0].mxu0
    %2276 = vmatprep.mubr.f32.mxu0 0.0
    %v2277 = vand.u32 %v1368, 4294901760
    %v2278 = vsub.f32 %v1368, %v2277
    %v2279 = vand.u32 %v2278, 4294901760
    %2280 = vmatmul.mubr.f32.gmra.mrb[0].mxu0 %v2279
    %v2281 = vpop.f32.mrb[0].mxu0
    %v2282 = vadd.f32 %v2074, %v2281
    %v2283 = vpop.f32.mrb[0].mxu0
    %2284 = vmatprep.mubr.f32.mxu0 0.0
    %v2285 = vand.u32 %v1374, 4294901760
    %v2286 = vsub.f32 %v1374, %v2285
    %v2287 = vand.u32 %v2286, 4294901760
    %2288 = vmatmul.mubr.f32.gmra.mrb[0].mxu0 %v2287
    %v2289 = vpop.f32.mrb[0].mxu0
    %v2290 = vadd.f32 %v2081, %v2289
    %v2291 = vpop.f32.mrb[0].mxu0
    %2292 = vdwg.mxu0
    %2293 = vmatprep.subr.mxu0 0.0
    %v2294 = vand.u32 %v1377, 4294901760
    %v2295 = vsub.f32 %v1377, %v2294
    %v2296 = vand.u32 %v2295, 4294901760
    %2297 = vmatpush1.msra.mxu0 %v2296
    %2298 = vmatprep.subr.mxu0 0.0
    %v2299 = vand.u32 %v1378, 4294901760
    %v2300 = vsub.f32 %v1378, %v2299
    %v2301 = vand.u32 %v2300, 4294901760
    %2302 = vmatpush1.msra.mxu0 %v2301
    %2303 = vmatprep.subr.mxu0 0.0
    %v2304 = vand.u32 %v1379, 4294901760
    %v2305 = vsub.f32 %v1379, %v2304
    %v2306 = vand.u32 %v2305, 4294901760
    %2307 = vmatpush1.msra.mxu0 %v2306
    %2308 = vmatprep.subr.mxu0 0.0
    %v2309 = vand.u32 %v1380, 4294901760
    %v2310 = vsub.f32 %v1380, %v2309
    %v2311 = vand.u32 %v2310, 4294901760
    %2312 = vmatpush1.msra.mxu0 %v2311
    %2313 = vmatprep.subr.mxu0 0.0
    %v2314 = vand.u32 %v1381, 4294901760
    %v2315 = vsub.f32 %v1381, %v2314
    %v2316 = vand.u32 %v2315, 4294901760
    %2317 = vmatpush1.msra.mxu0 %v2316
    %2318 = vmatprep.subr.mxu0 0.0
    %v2319 = vand.u32 %v1382, 4294901760
    %v2320 = vsub.f32 %v1382, %v2319
    %v2321 = vand.u32 %v2320, 4294901760
    %2322 = vmatpush1.msra.mxu0 %v2321
    %2323 = vmatprep.subr.mxu0 0.0
    %v2324 = vand.u32 %v1383, 4294901760
    %v2325 = vsub.f32 %v1383, %v2324
    %v2326 = vand.u32 %v2325, 4294901760
    %2327 = vmatpush1.msra.mxu0 %v2326
    %2328 = vmatprep.subr.mxu0 0.0
    %v2329 = vand.u32 %v1384, 4294901760
    %v2330 = vsub.f32 %v1384, %v2329
    %v2331 = vand.u32 %v2330, 4294901760
    %2332 = vmatpush1.msra.mxu0 %v2331
    %2333 = vmatprep.subr.mxu0 0.0
    %v2334 = vand.u32 %v1385, 4294901760
    %v2335 = vsub.f32 %v1385, %v2334
    %v2336 = vand.u32 %v2335, 4294901760
    %2337 = vmatpush1.msra.mxu0 %v2336
    %2338 = vmatprep.subr.mxu0 0.0
    %v2339 = vand.u32 %v1386, 4294901760
    %v2340 = vsub.f32 %v1386, %v2339
    %v2341 = vand.u32 %v2340, 4294901760
    %2342 = vmatpush1.msra.mxu0 %v2341
    %2343 = vmatprep.subr.mxu0 0.0
    %v2344 = vand.u32 %v1387, 4294901760
    %v2345 = vsub.f32 %v1387, %v2344
    %v2346 = vand.u32 %v2345, 4294901760
    %2347 = vmatpush1.msra.mxu0 %v2346
    %2348 = vmatprep.subr.mxu0 0.0
    %v2349 = vand.u32 %v1388, 4294901760
    %v2350 = vsub.f32 %v1388, %v2349
    %v2351 = vand.u32 %v2350, 4294901760
    %2352 = vmatpush1.msra.mxu0 %v2351
    %2353 = vmatprep.subr.mxu0 0.0
    %v2354 = vand.u32 %v1389, 4294901760
    %v2355 = vsub.f32 %v1389, %v2354
    %v2356 = vand.u32 %v2355, 4294901760
    %2357 = vmatpush1.msra.mxu0 %v2356
    %2358 = vmatprep.subr.mxu0 0.0
    %v2359 = vand.u32 %v1390, 4294901760
    %v2360 = vsub.f32 %v1390, %v2359
    %v2361 = vand.u32 %v2360, 4294901760
    %2362 = vmatpush1.msra.mxu0 %v2361
    %2363 = vmatprep.subr.mxu0 0.0
    %v2364 = vand.u32 %v1391, 4294901760
    %v2365 = vsub.f32 %v1391, %v2364
    %v2366 = vand.u32 %v2365, 4294901760
    %2367 = vmatpush1.msra.mxu0 %v2366
    %2368 = vmatprep.subr.mxu0 0.0
    %v2369 = vand.u32 %v1392, 4294901760
    %v2370 = vsub.f32 %v1392, %v2369
    %v2371 = vand.u32 %v2370, 4294901760
    %2372 = vmatpush1.msra.mxu0 %v2371
    %2373 = vmatprep.subr.mxu0 0.0
    %2374 = vmatpush1.msra.mxu0 0.0
    %2375 = vmatprep.subr.mxu0 0.0
    %2376 = vmatpush1.msra.mxu0 0.0
    %2377 = vmatprep.subr.mxu0 0.0
    %2378 = vmatpush1.msra.mxu0 0.0
    %2379 = vmatprep.subr.mxu0 0.0
    %2380 = vmatpush1.msra.mxu0 0.0
    %2381 = vmatprep.subr.mxu0 0.0
    %2382 = vmatpush1.msra.mxu0 0.0
    %2383 = vmatprep.subr.mxu0 0.0
    %2384 = vmatpush1.msra.mxu0 0.0
    %2385 = vmatprep.subr.mxu0 0.0
    %2386 = vmatpush1.msra.mxu0 0.0
    %2387 = vmatprep.subr.mxu0 0.0
    %2388 = vmatpush1.msra.mxu0 0.0
    %2389 = vmatprep.subr.mxu0 0.0
    %2390 = vmatpush1.msra.mxu0 0.0
    %2391 = vmatprep.subr.mxu0 0.0
    %2392 = vmatpush1.msra.mxu0 0.0
    %2393 = vmatprep.subr.mxu0 0.0
    %2394 = vmatpush1.msra.mxu0 0.0
    %2395 = vmatprep.subr.mxu0 0.0
    %2396 = vmatpush1.msra.mxu0 0.0
    %2397 = vmatprep.subr.mxu0 0.0
    %2398 = vmatpush1.msra.mxu0 0.0
    %2399 = vmatprep.subr.mxu0 0.0
    %2400 = vmatpush1.msra.mxu0 0.0
    %2401 = vmatprep.subr.mxu0 0.0
    %2402 = vmatpush1.msra.mxu0 0.0
    %2403 = vmatprep.subr.mxu0 0.0
    %2404 = vmatpush1.msra.mxu0 0.0
    %2405 = vmatprep.mubr.f32.mxu0 0.0
    %v2406 = vand.u32 %v1284, 4294901760
    %2407 = vmatmul.mubr.f32.gmra.mrb[0].mxu0 %v2406
    %v2408 = vpop.f32.mrb[0].mxu0
    %v2409 = vadd.f32 %v2170, %v2408
    %v2410 = vpop.f32.mrb[0].mxu0
    %2411 = vmatprep.mubr.f32.mxu0 0.0
    %v2412 = vand.u32 %v1290, 4294901760
    %2413 = vmatmul.mubr.f32.gmra.mrb[0].mxu0 %v2412
    %v2414 = vpop.f32.mrb[0].mxu0
    %v2415 = vadd.f32 %v2178, %v2414
    %v2416 = vpop.f32.mrb[0].mxu0
    %2417 = vmatprep.mubr.f32.mxu0 0.0
    %v2418 = vand.u32 %v1296, 4294901760
    %2419 = vmatmul.mubr.f32.gmra.mrb[0].mxu0 %v2418
    %v2420 = vpop.f32.mrb[0].mxu0
    %v2421 = vadd.f32 %v2186, %v2420
    %v2422 = vpop.f32.mrb[0].mxu0
    %2423 = vmatprep.mubr.f32.mxu0 0.0
    %v2424 = vand.u32 %v1302, 4294901760
    %2425 = vmatmul.mubr.f32.gmra.mrb[0].mxu0 %v2424
    %v2426 = vpop.f32.mrb[0].mxu0
    %v2427 = vadd.f32 %v2194, %v2426
    %v2428 = vpop.f32.mrb[0].mxu0
    %2429 = vmatprep.mubr.f32.mxu0 0.0
    %v2430 = vand.u32 %v1308, 4294901760
    %2431 = vmatmul.mubr.f32.gmra.mrb[0].mxu0 %v2430
    %v2432 = vpop.f32.mrb[0].mxu0
    %v2433 = vadd.f32 %v2202, %v2432
    %v2434 = vpop.f32.mrb[0].mxu0
    %2435 = vmatprep.mubr.f32.mxu0 0.0
    %v2436 = vand.u32 %v1314, 4294901760
    %2437 = vmatmul.mubr.f32.gmra.mrb[0].mxu0 %v2436
    %v2438 = vpop.f32.mrb[0].mxu0
    %v2439 = vadd.f32 %v2210, %v2438
    %v2440 = vpop.f32.mrb[0].mxu0
    %2441 = vmatprep.mubr.f32.mxu0 0.0
    %v2442 = vand.u32 %v1320, 4294901760
    %2443 = vmatmul.mubr.f32.gmra.mrb[0].mxu0 %v2442
    %v2444 = vpop.f32.mrb[0].mxu0
    %v2445 = vadd.f32 %v2218, %v2444
    %v2446 = vpop.f32.mrb[0].mxu0
    %2447 = vmatprep.mubr.f32.mxu0 0.0
    %v2448 = vand.u32 %v1326, 4294901760
    %2449 = vmatmul.mubr.f32.gmra.mrb[0].mxu0 %v2448
    %v2450 = vpop.f32.mrb[0].mxu0
    %v2451 = vadd.f32 %v2226, %v2450
    %v2452 = vpop.f32.mrb[0].mxu0
    %2453 = vmatprep.mubr.f32.mxu0 0.0
    %v2454 = vand.u32 %v1332, 4294901760
    %2455 = vmatmul.mubr.f32.gmra.mrb[0].mxu0 %v2454
    %v2456 = vpop.f32.mrb[0].mxu0
    %v2457 = vadd.f32 %v2234, %v2456
    %v2458 = vpop.f32.mrb[0].mxu0
    %2459 = vmatprep.mubr.f32.mxu0 0.0
    %v2460 = vand.u32 %v1338, 4294901760
    %2461 = vmatmul.mubr.f32.gmra.mrb[0].mxu0 %v2460
    %v2462 = vpop.f32.mrb[0].mxu0
    %v2463 = vadd.f32 %v2242, %v2462
    %v2464 = vpop.f32.mrb[0].mxu0
    %2465 = vmatprep.mubr.f32.mxu0 0.0
    %v2466 = vand.u32 %v1344, 4294901760
    %2467 = vmatmul.mubr.f32.gmra.mrb[0].mxu0 %v2466
    %v2468 = vpop.f32.mrb[0].mxu0
    %v2469 = vadd.f32 %v2250, %v2468
    %v2470 = vpop.f32.mrb[0].mxu0
    %2471 = vmatprep.mubr.f32.mxu0 0.0
    %v2472 = vand.u32 %v1350, 4294901760
    %2473 = vmatmul.mubr.f32.gmra.mrb[0].mxu0 %v2472
    %v2474 = vpop.f32.mrb[0].mxu0
    %v2475 = vadd.f32 %v2258, %v2474
    %v2476 = vpop.f32.mrb[0].mxu0
    %2477 = vmatprep.mubr.f32.mxu0 0.0
    %v2478 = vand.u32 %v1356, 4294901760
    %2479 = vmatmul.mubr.f32.gmra.mrb[0].mxu0 %v2478
    %v2480 = vpop.f32.mrb[0].mxu0
    %v2481 = vadd.f32 %v2266, %v2480
    %v2482 = vpop.f32.mrb[0].mxu0
    %2483 = vmatprep.mubr.f32.mxu0 0.0
    %v2484 = vand.u32 %v1362, 4294901760
    %2485 = vmatmul.mubr.f32.gmra.mrb[0].mxu0 %v2484
    %v2486 = vpop.f32.mrb[0].mxu0
    %v2487 = vadd.f32 %v2274, %v2486
    %v2488 = vpop.f32.mrb[0].mxu0
    %2489 = vmatprep.mubr.f32.mxu0 0.0
    %v2490 = vand.u32 %v1368, 4294901760
    %2491 = vmatmul.mubr.f32.gmra.mrb[0].mxu0 %v2490
    %v2492 = vpop.f32.mrb[0].mxu0
    %v2493 = vadd.f32 %v2282, %v2492
    %v2494 = vpop.f32.mrb[0].mxu0
    %2495 = vmatprep.mubr.f32.mxu0 0.0
    %v2496 = vand.u32 %v1374, 4294901760
    %2497 = vmatmul.mubr.f32.gmra.mrb[0].mxu0 %v2496
    %v2498 = vpop.f32.mrb[0].mxu0
    %v2499 = vadd.f32 %v2290, %v2498
    %v2500 = vpop.f32.mrb[0].mxu0
    %2501 = vdwg.mxu0
    %2502 = vmatprep.subr.mxu0 0.0
    %v2503 = vand.u32 %v1377, 4294901760
    %2504 = vmatpush1.msra.mxu0 %v2503
    %2505 = vmatprep.subr.mxu0 0.0
    %v2506 = vand.u32 %v1378, 4294901760
    %2507 = vmatpush1.msra.mxu0 %v2506
    %2508 = vmatprep.subr.mxu0 0.0
    %v2509 = vand.u32 %v1379, 4294901760
    %2510 = vmatpush1.msra.mxu0 %v2509
    %2511 = vmatprep.subr.mxu0 0.0
    %v2512 = vand.u32 %v1380, 4294901760
    %2513 = vmatpush1.msra.mxu0 %v2512
    %2514 = vmatprep.subr.mxu0 0.0
    %v2515 = vand.u32 %v1381, 4294901760
    %2516 = vmatpush1.msra.mxu0 %v2515
    %2517 = vmatprep.subr.mxu0 0.0
    %v2518 = vand.u32 %v1382, 4294901760
    %2519 = vmatpush1.msra.mxu0 %v2518
    %2520 = vmatprep.subr.mxu0 0.0
    %v2521 = vand.u32 %v1383, 4294901760
    %2522 = vmatpush1.msra.mxu0 %v2521
    %2523 = vmatprep.subr.mxu0 0.0
    %v2524 = vand.u32 %v1384, 4294901760
    %2525 = vmatpush1.msra.mxu0 %v2524
    %2526 = vmatprep.subr.mxu0 0.0
    %v2527 = vand.u32 %v1385, 4294901760
    %2528 = vmatpush1.msra.mxu0 %v2527
    %2529 = vmatprep.subr.mxu0 0.0
    %v2530 = vand.u32 %v1386, 4294901760
    %2531 = vmatpush1.msra.mxu0 %v2530
    %2532 = vmatprep.subr.mxu0 0.0
    %v2533 = vand.u32 %v1387, 4294901760
    %2534 = vmatpush1.msra.mxu0 %v2533
    %2535 = vmatprep.subr.mxu0 0.0
    %v2536 = vand.u32 %v1388, 4294901760
    %2537 = vmatpush1.msra.mxu0 %v2536
    %2538 = vmatprep.subr.mxu0 0.0
    %v2539 = vand.u32 %v1389, 4294901760
    %2540 = vmatpush1.msra.mxu0 %v2539
    %2541 = vmatprep.subr.mxu0 0.0
    %v2542 = vand.u32 %v1390, 4294901760
    %2543 = vmatpush1.msra.mxu0 %v2542
    %2544 = vmatprep.subr.mxu0 0.0
    %v2545 = vand.u32 %v1391, 4294901760
    %2546 = vmatpush1.msra.mxu0 %v2545
    %2547 = vmatprep.subr.mxu0 0.0
    %v2548 = vand.u32 %v1392, 4294901760
    %2549 = vmatpush1.msra.mxu0 %v2548
    %2550 = vmatprep.subr.mxu0 0.0
    %2551 = vmatpush1.msra.mxu0 0.0
    %2552 = vmatprep.subr.mxu0 0.0
    %2553 = vmatpush1.msra.mxu0 0.0
    %2554 = vmatprep.subr.mxu0 0.0
    %2555 = vmatpush1.msra.mxu0 0.0
    %2556 = vmatprep.subr.mxu0 0.0
    %2557 = vmatpush1.msra.mxu0 0.0
    %2558 = vmatprep.subr.mxu0 0.0
    %2559 = vmatpush1.msra.mxu0 0.0
    %2560 = vmatprep.subr.mxu0 0.0
    %2561 = vmatpush1.msra.mxu0 0.0
    %2562 = vmatprep.subr.mxu0 0.0
    %2563 = vmatpush1.msra.mxu0 0.0
    %2564 = vmatprep.subr.mxu0 0.0
    %2565 = vmatpush1.msra.mxu0 0.0
    %2566 = vmatprep.subr.mxu0 0.0
    %2567 = vmatpush1.msra.mxu0 0.0
    %2568 = vmatprep.subr.mxu0 0.0
    %2569 = vmatpush1.msra.mxu0 0.0
    %2570 = vmatprep.subr.mxu0 0.0
    %2571 = vmatpush1.msra.mxu0 0.0
    %2572 = vmatprep.subr.mxu0 0.0
    %2573 = vmatpush1.msra.mxu0 0.0
    %2574 = vmatprep.subr.mxu0 0.0
    %2575 = vmatpush1.msra.mxu0 0.0
    %2576 = vmatprep.subr.mxu0 0.0
    %2577 = vmatpush1.msra.mxu0 0.0
    %2578 = vmatprep.subr.mxu0 0.0
    %2579 = vmatpush1.msra.mxu0 0.0
    %2580 = vmatprep.subr.mxu0 0.0
    %2581 = vmatpush1.msra.mxu0 0.0
    %2582 = vmatprep.mubr.f32.mxu0 0.0
    %v2583 = vand.u32 %v1284, 4294901760
    %2584 = vmatmul.mubr.f32.gmra.mrb[0].mxu0 %v2583
    %v2585 = vpop.f32.mrb[0].mxu0
    %v2586 = vadd.f32 %v2409, %v2585
    %v2587 = vpop.f32.mrb[0].mxu0
    %2588 = vmatprep.mubr.f32.mxu0 0.0
    %v2589 = vand.u32 %v1290, 4294901760
    %2590 = vmatmul.mubr.f32.gmra.mrb[0].mxu0 %v2589
    %v2591 = vpop.f32.mrb[0].mxu0
    %v2592 = vadd.f32 %v2415, %v2591
    %v2593 = vpop.f32.mrb[0].mxu0
    %2594 = vmatprep.mubr.f32.mxu0 0.0
    %v2595 = vand.u32 %v1296, 4294901760
    %2596 = vmatmul.mubr.f32.gmra.mrb[0].mxu0 %v2595
    %v2597 = vpop.f32.mrb[0].mxu0
    %v2598 = vadd.f32 %v2421, %v2597
    %v2599 = vpop.f32.mrb[0].mxu0
    %2600 = vmatprep.mubr.f32.mxu0 0.0
    %v2601 = vand.u32 %v1302, 4294901760
    %2602 = vmatmul.mubr.f32.gmra.mrb[0].mxu0 %v2601
    %v2603 = vpop.f32.mrb[0].mxu0
    %v2604 = vadd.f32 %v2427, %v2603
    %v2605 = vpop.f32.mrb[0].mxu0
    %2606 = vmatprep.mubr.f32.mxu0 0.0
    %v2607 = vand.u32 %v1308, 4294901760
    %2608 = vmatmul.mubr.f32.gmra.mrb[0].mxu0 %v2607
    %v2609 = vpop.f32.mrb[0].mxu0
    %v2610 = vadd.f32 %v2433, %v2609
    %v2611 = vpop.f32.mrb[0].mxu0
    %2612 = vmatprep.mubr.f32.mxu0 0.0
    %v2613 = vand.u32 %v1314, 4294901760
    %2614 = vmatmul.mubr.f32.gmra.mrb[0].mxu0 %v2613
    %v2615 = vpop.f32.mrb[0].mxu0
    %v2616 = vadd.f32 %v2439, %v2615
    %v2617 = vpop.f32.mrb[0].mxu0
    %2618 = vmatprep.mubr.f32.mxu0 0.0
    %v2619 = vand.u32 %v1320, 4294901760
    %2620 = vmatmul.mubr.f32.gmra.mrb[0].mxu0 %v2619
    %v2621 = vpop.f32.mrb[0].mxu0
    %v2622 = vadd.f32 %v2445, %v2621
    %v2623 = vpop.f32.mrb[0].mxu0
    %2624 = vmatprep.mubr.f32.mxu0 0.0
    %v2625 = vand.u32 %v1326, 4294901760
    %2626 = vmatmul.mubr.f32.gmra.mrb[0].mxu0 %v2625
    %v2627 = vpop.f32.mrb[0].mxu0
    %v2628 = vadd.f32 %v2451, %v2627
    %v2629 = vpop.f32.mrb[0].mxu0
    %2630 = vmatprep.mubr.f32.mxu0 0.0
    %v2631 = vand.u32 %v1332, 4294901760
    %2632 = vmatmul.mubr.f32.gmra.mrb[0].mxu0 %v2631
    %v2633 = vpop.f32.mrb[0].mxu0
    %v2634 = vadd.f32 %v2457, %v2633
    %v2635 = vpop.f32.mrb[0].mxu0
    %2636 = vmatprep.mubr.f32.mxu0 0.0
    %v2637 = vand.u32 %v1338, 4294901760
    %2638 = vmatmul.mubr.f32.gmra.mrb[0].mxu0 %v2637
    %v2639 = vpop.f32.mrb[0].mxu0
    %v2640 = vadd.f32 %v2463, %v2639
    %v2641 = vpop.f32.mrb[0].mxu0
    %2642 = vmatprep.mubr.f32.mxu0 0.0
    %v2643 = vand.u32 %v1344, 4294901760
    %2644 = vmatmul.mubr.f32.gmra.mrb[0].mxu0 %v2643
    %v2645 = vpop.f32.mrb[0].mxu0
    %v2646 = vadd.f32 %v2469, %v2645
    %v2647 = vpop.f32.mrb[0].mxu0
    %2648 = vmatprep.mubr.f32.mxu0 0.0
    %v2649 = vand.u32 %v1350, 4294901760
    %2650 = vmatmul.mubr.f32.gmra.mrb[0].mxu0 %v2649
    %v2651 = vpop.f32.mrb[0].mxu0
    %v2652 = vadd.f32 %v2475, %v2651
    %v2653 = vpop.f32.mrb[0].mxu0
    %2654 = vmatprep.mubr.f32.mxu0 0.0
    %v2655 = vand.u32 %v1356, 4294901760
    %2656 = vmatmul.mubr.f32.gmra.mrb[0].mxu0 %v2655
    %v2657 = vpop.f32.mrb[0].mxu0
    %v2658 = vadd.f32 %v2481, %v2657
    %v2659 = vpop.f32.mrb[0].mxu0
    %2660 = vmatprep.mubr.f32.mxu0 0.0
    %v2661 = vand.u32 %v1362, 4294901760
    %2662 = vmatmul.mubr.f32.gmra.mrb[0].mxu0 %v2661
    %v2663 = vpop.f32.mrb[0].mxu0
    %v2664 = vadd.f32 %v2487, %v2663
    %v2665 = vpop.f32.mrb[0].mxu0
    %2666 = vmatprep.mubr.f32.mxu0 0.0
    %v2667 = vand.u32 %v1368, 4294901760
    %2668 = vmatmul.mubr.f32.gmra.mrb[0].mxu0 %v2667
    %v2669 = vpop.f32.mrb[0].mxu0
    %v2670 = vadd.f32 %v2493, %v2669
    %v2671 = vpop.f32.mrb[0].mxu0
    %2672 = vmatprep.mubr.f32.mxu0 0.0
    %v2673 = vand.u32 %v1374, 4294901760
    %2674 = vmatmul.mubr.f32.gmra.mrb[0].mxu0 %v2673
    %v2675 = vpop.f32.mrb[0].mxu0
    %v2676 = vadd.f32 %v2499, %v2675
    %v2677 = vpop.f32.mrb[0].mxu0
    %2678 = vdwg.mxu0
    %2679 = vst [vmem:[#allocation9] sm:$0xff] %v2586
    %2680 = vst [vmem:[#allocation9 + $0x8] sm:$0xff] %v2592
    %2681 = vst [vmem:[#allocation9 + $0x10] sm:$0xff] %v2598
    %2682 = vst [vmem:[#allocation9 + $0x18] sm:$0xff] %v2604
    %2683 = vst [vmem:[#allocation9 + $0x20] sm:$0xff] %v2610
    %2684 = vst [vmem:[#allocation9 + $0x28] sm:$0xff] %v2616
    %2685 = vst [vmem:[#allocation9 + $0x30] sm:$0xff] %v2622
    %2686 = vst [vmem:[#allocation9 + $0x38] sm:$0xff] %v2628
    %2687 = vst [vmem:[#allocation9 + $0x40] sm:$0xff] %v2634
    %2688 = vst [vmem:[#allocation9 + $0x48] sm:$0xff] %v2640
    %2689 = vst [vmem:[#allocation9 + $0x50] sm:$0xff] %v2646
    %2690 = vst [vmem:[#allocation9 + $0x58] sm:$0xff] %v2652
    %2691 = vst [vmem:[#allocation9 + $0x60] sm:$0xff] %v2658
    %2692 = vst [vmem:[#allocation9 + $0x68] sm:$0xff] %v2664
    %2693 = vst [vmem:[#allocation9 + $0x70] sm:$0xff] %v2670
    %2694 = vst [vmem:[#allocation9 + $0x78] sm:$0xff] %v2676
    %v2695 = vlaneseq
    %v2696 = vand.u32 %v2695, 127
    %vm2697 = vcmp.eq.s32.totalorder %v2696, 32
    %v2698 = vsel %vm2697, 1.0, %v1284
    %v2699 = vsel %vm2697, 1.0, %v1290
    %v2700 = vsel %vm2697, 1.0, %v1296
    %v2701 = vsel %vm2697, 1.0, %v1302
    %v2702 = vsel %vm2697, 1.0, %v1308
    %v2703 = vsel %vm2697, 1.0, %v1314
    %v2704 = vsel %vm2697, 1.0, %v1320
    %v2705 = vsel %vm2697, 1.0, %v1326
    %v2706 = vsel %vm2697, 1.0, %v1332
    %v2707 = vsel %vm2697, 1.0, %v1338
    %v2708 = vsel %vm2697, 1.0, %v1344
    %v2709 = vsel %vm2697, 1.0, %v1350
    %v2710 = vsel %vm2697, 1.0, %v1356
    %v2711 = vsel %vm2697, 1.0, %v1362
    %v2712 = vsel %vm2697, 1.0, %v1368
    %v2713 = vsel %vm2697, 1.0, %v1374
    %2714 = vst [vmem:[#allocation8] sm:$0xff] %v2698
    %2715 = vst [vmem:[#allocation8 + $0x8] sm:$0xff] %v2699
    %2716 = vst [vmem:[#allocation8 + $0x10] sm:$0xff] %v2700
    %2717 = vst [vmem:[#allocation8 + $0x18] sm:$0xff] %v2701
    %2718 = vst [vmem:[#allocation8 + $0x20] sm:$0xff] %v2702
    %2719 = vst [vmem:[#allocation8 + $0x28] sm:$0xff] %v2703
    %2720 = vst [vmem:[#allocation8 + $0x30] sm:$0xff] %v2704
    %2721 = vst [vmem:[#allocation8 + $0x38] sm:$0xff] %v2705
    %2722 = vst [vmem:[#allocation8 + $0x40] sm:$0xff] %v2706
    %2723 = vst [vmem:[#allocation8 + $0x48] sm:$0xff] %v2707
    %2724 = vst [vmem:[#allocation8 + $0x50] sm:$0xff] %v2708
    %2725 = vst [vmem:[#allocation8 + $0x58] sm:$0xff] %v2709
    %2726 = vst [vmem:[#allocation8 + $0x60] sm:$0xff] %v2710
    %2727 = vst [vmem:[#allocation8 + $0x68] sm:$0xff] %v2711
    %2728 = vst [vmem:[#allocation8 + $0x70] sm:$0xff] %v2712
    %2729 = vst [vmem:[#allocation8 + $0x78] sm:$0xff] %v2713
    // Predicated region
    $region26: #{tpu_custom_call.1} parent=1 // pred_check
      _
    $region27: #{tpu_custom_call.1} parent=1 // pred_check_branch
      %2731 = sbr.rel (0) target = $region29
    $region28: #{tpu_custom_call.1} parent=1 // pred_region
      %s2733 = ssub.s32 2048, 2048
      %2734 = vsyncadd [#allocation4], %s2733
      %s2735 = sshll.u32 [#allocation8], 4
      %s2736 = int_to_ptr.vmem [resolvable:$true] %s2735
      %2741 = dma.vmem_to_hbm [thread:$0]  %s2736, 2048, %s3, [#allocation4], 128, 128, 8
    $region29: #{tpu_custom_call.1} parent=1 // pred_fallthru
      _
    // Predicated region
    $region30: #{tpu_custom_call.1} parent=1 // pred_check
      _
    $region31: #{tpu_custom_call.1} parent=1 // pred_check_branch
      %2743 = sbr.rel (0) target = $region33
    $region32: #{tpu_custom_call.1} parent=1 // pred_region
      %s2745 = ssub.s32 2048, 2048
      %2746 = vsyncadd [#allocation10], %s2745
      %s2747 = sshll.u32 [#allocation9], 4
      %s2748 = int_to_ptr.vmem [resolvable:$true] %s2747
      %2753 = dma.vmem_to_hbm [thread:$0]  %s2748, 2048, %s4, [#allocation10], 128, 128, 8
    $region33: #{tpu_custom_call.1} parent=1 // pred_fallthru
      _
    // Predicated region
    $region34: #{tpu_custom_call.1} parent=1 // pred_check
      _
    $region35: #{tpu_custom_call.1} parent=1 // pred_check_branch
      %2755 = sbr.rel (0) target = $region37
    $region36: #{tpu_custom_call.1} parent=1 // pred_region
      %2756 = dma.done [#allocation4], 2048
    $region37: #{tpu_custom_call.1} parent=1 // pred_fallthru
      _
    // Predicated region
    $region38: #{tpu_custom_call.1} parent=1 // pred_check
      _
    $region39: #{tpu_custom_call.1} parent=1 // pred_check_branch
      %2758 = sbr.rel (0) target = $region41
    $region40: #{tpu_custom_call.1} parent=1 // pred_region
      %2759 = dma.done [#allocation10], 2048
    $region41: #{tpu_custom_call.1} parent=1 // pred_fallthru
      _
    %2760 = vsyncpa [#allocation3], 1
    %2761 = vsyncpa [#allocation6], 1
    %2762 = vsyncpa [#allocation4], 1
    %2763 = vsyncpa [#allocation10], 1

</llo_original>
